<compile_context>
chip_gen: v5e
topology: v5e:2x2
jax: 0.10.0
libtpu: 0.0.40
codegen_flags: <defaults>
</compile_context>

<pallas_src>
import jax
import jax.numpy as jnp
from jax import lax
from jax.experimental import pallas as pl
from jax.experimental.pallas import tpu as pltpu

BN_EPS = 1e-5


def _conv_block_kernel(x_ref, dw_ref, pw_ref, gamma_ref, beta_ref, alpha_ref,
                       o_ref, xpad_ref):
    """Fully fused ConvBlock forward (single invocation, whole batch).

    x_ref    : (N, Cin, H, W)        VMEM  input image batch (NCHW)
    dw_ref   : (Cin, 9)              SMEM  depthwise 3x3 taps (kh*3 + kw)
    pw_ref   : (Cout, Cin)           SMEM  pointwise 1x1 weights
    gamma_ref: (Cout,)               SMEM  BN weight
    beta_ref : (Cout,)               SMEM  BN bias
    alpha_ref: (Cout,)               SMEM  PReLU slope
    o_ref    : (N, Cout, H, W)       VMEM  output (NCHW)
    xpad_ref : (N, Cin, H+2, W+2)    VMEM  zero-padded input scratch
    """
    N, Cin, H, W = x_ref.shape
    Cout = o_ref.shape[1]

    # Zero-padded input (padding=1) in VMEM: one block zero + one sliced block store
    # (rows on sublanes, columns on lanes).
    xpad_ref[...] = jnp.zeros_like(xpad_ref)
    xpad_ref[:, :, 1:H + 1, 1:W + 1] = x_ref[...]

    # Depthwise 3x3 (stride 1): per input channel, 9 shifted VPU FMAs.  kh selects a
    # sublane window, kw a 0/1/2-lane shift; taps are scalars read from SMEM.
    dwc = []
    for ci in range(Cin):
        plane = xpad_ref[:, ci, :, :]                     # (N, H+2, W+2)
        acc = plane[:, 0:H, 0:W] * dw_ref[ci, 0]
        for t in range(1, 9):
            kh, kw = t // 3, t % 3
            acc = acc + plane[:, kh:kh + H, kw:kw + W] * dw_ref[ci, t]
        dwc.append(acc)                                    # (N, H, W)

    # Per output channel: pointwise 1x1 as Cin scalar FMAs on the VPU (an 8x4 matmul
    # would waste the MXU), then training-mode BatchNorm (two-pass, biased variance)
    # and PReLU, written straight to the NCHW output -- the conv result never leaves
    # registers/VMEM.
    inv_n = 1.0 / float(N * H * W)
    for co in range(Cout):
        y = dwc[0] * pw_ref[co, 0]
        for ci in range(1, Cin):
            y = y + dwc[ci] * pw_ref[co, ci]
        mean = jnp.sum(y) * inv_n
        yc = y - mean
        var = jnp.sum(yc * yc) * inv_n                     # biased (training-mode) variance
        scale = gamma_ref[co] * lax.rsqrt(var + BN_EPS)
        z = yc * scale + beta_ref[co]
        o_ref[:, co] = jnp.where(z >= 0.0, z, z * alpha_ref[co])


def conv_block(x_nchw, dw_oihw, pw_oihw, gamma, beta, alpha):
    """ConvBlock forward. x_nchw: (N, Cin, H, W) float32 -> (N, Cout, H, W) float32."""
    N, Cin, H, W = x_nchw.shape
    Cout = pw_oihw.shape[0]

    x = x_nchw.astype(jnp.float32)
    dwk = dw_oihw.reshape(Cin, 9).astype(jnp.float32)        # (Cin, 1, 3, 3) -> (Cin, 9)
    pwk = pw_oihw.reshape(Cout, Cin).astype(jnp.float32)     # (Cout, Cin, 1, 1) -> (Cout, Cin)
    g = gamma.astype(jnp.float32)
    b = beta.astype(jnp.float32)
    a = alpha.astype(jnp.float32)

    flops = N * H * W * (2 * 9 * Cin + 2 * Cout * Cin + 7 * Cout)
    bytes_accessed = 4 * (N * Cin * H * W + N * Cout * H * W
                          + Cin * 9 + Cout * Cin + 3 * Cout)

    vmem = pl.BlockSpec(memory_space=pltpu.MemorySpace.VMEM)
    smem = pl.BlockSpec(memory_space=pltpu.MemorySpace.SMEM)

    return pl.pallas_call(
        _conv_block_kernel,
        out_shape=jax.ShapeDtypeStruct((N, Cout, H, W), jnp.float32),
        in_specs=[vmem, smem, smem, smem, smem, smem],
        out_specs=vmem,
        scratch_shapes=[pltpu.VMEM((N, Cin, H + 2, W + 2), jnp.float32)],
        compiler_params=pltpu.CompilerParams(
            # Explicit scoped-VMEM limit: valid on v5e (16 MiB default), v6e and v7x
            # (32 MiB default, 64 MiB physical).  Whole problem is ~0.2 MiB of VMEM.
            vmem_limit_bytes=32 * 1024 * 1024,
        ),
        cost_estimate=pl.CostEstimate(
            flops=flops, transcendentals=Cout, bytes_accessed=bytes_accessed),
    )(x, dwk, pwk, g, b, a)


def conv_block_reference(x_nchw, dw_oihw, pw_oihw, gamma, beta, alpha):
    """Pure-JAX reference (mirrors the PyTorch forward)."""
    Cin = x_nchw.shape[1]
    dn = ('NCHW', 'OIHW', 'NCHW')
    dw = lax.conv_general_dilated(x_nchw, dw_oihw, (1, 1), ((1, 1), (1, 1)),
                                  dimension_numbers=dn, feature_group_count=Cin)
    pw = lax.conv_general_dilated(dw, pw_oihw, (1, 1), 'VALID', dimension_numbers=dn)
    mean = pw.mean(axis=(0, 2, 3), keepdims=True)
    var = ((pw - mean) ** 2).mean(axis=(0, 2, 3), keepdims=True)
    y = (pw - mean) / jnp.sqrt(var + BN_EPS)
    y = y * gamma[None, :, None, None] + beta[None, :, None, None]
    return jnp.where(y >= 0.0, y, alpha[None, :, None, None] * y)


if __name__ == "__main__":
    # Small shapes consistent with the module: ConvBlock(in_channels=4, out_channels=8,
    # kernel_size=3, stride=1, padding=1) applied to x of shape (2, 4, 16, 16).
    N, Cin, Cout, H, W = 2, 4, 8, 16, 16

    key = jax.random.PRNGKey(0)
    kx, kdw, kpw, kg, kb = jax.random.split(key, 5)

    x = jax.random.normal(kx, (N, Cin, H, W), jnp.float32)

    # Deterministic parameters (shapes from the module; bias=False since use_bn=True).
    dw_oihw = 0.3 * jax.random.normal(kdw, (Cin, 1, 3, 3), jnp.float32)     # depthwise weight
    pw_oihw = 0.3 * jax.random.normal(kpw, (Cout, Cin, 1, 1), jnp.float32)  # pointwise weight
    gamma = 1.0 + 0.1 * jax.random.normal(kg, (Cout,), jnp.float32)         # BN weight
    beta = 0.1 * jax.random.normal(kb, (Cout,), jnp.float32)                # BN bias
    alpha = jnp.full((Cout,), 0.25, jnp.float32)                            # PReLU default slope

    out = jax.block_until_ready(conv_block(x, dw_oihw, pw_oihw, gamma, beta, alpha))
    ref = jax.block_until_ready(conv_block_reference(x, dw_oihw, pw_oihw, gamma, beta, alpha))

    assert out.shape == (N, Cout, H, W), out.shape
    err = float(jnp.max(jnp.abs(out - ref)))
    assert jnp.allclose(out, ref, rtol=1e-2, atol=1e-2), err
    print("KERNEL_OK")
</pallas_src>

<mosaic_0001>
module attributes {stable_mosaic.version = 11 : i64} {
  func.func @_conv_block_kernel(%arg0: memref<2x4x16x16xf32, #tpu.memory_space<vmem>>, %arg1: memref<4x9xf32, #tpu.memory_space<smem>>, %arg2: memref<8x4xf32, #tpu.memory_space<smem>>, %arg3: memref<8xf32, #tpu.memory_space<smem>>, %arg4: memref<8xf32, #tpu.memory_space<smem>>, %arg5: memref<8xf32, #tpu.memory_space<smem>>, %arg6: memref<2x8x16x16xf32, #tpu.memory_space<vmem>>, %arg7: memref<2x4x18x18xf32, #tpu.memory_space<vmem>>) attributes {dimension_semantics = [], scalar_prefetch = 0 : i64, scratch_operands = 1 : i64, tpu.core_type = #tpu.core_type<tc>} {
    %cst = arith.constant 0.000000e+00 : f32
    %0 = vector.broadcast %cst : f32 to vector<2x4x18x18xf32>
    %c0 = arith.constant 0 : index
    %c0_0 = arith.constant 0 : index
    %c0_1 = arith.constant 0 : index
    %c0_2 = arith.constant 0 : index
    %1 = vector.load %arg7[%c0, %c0_0, %c0_1, %c0_2] : memref<2x4x18x18xf32, #tpu.memory_space<vmem>>, vector<2x4x18x18xf32>
    tpu.vector_store %arg7[%c0, %c0_0, %c0_1, %c0_2], %0 {strides = array<i32>} : memref<2x4x18x18xf32, #tpu.memory_space<vmem>>, vector<2x4x18x18xf32>,
    %c0_3 = arith.constant 0 : index
    %c0_4 = arith.constant 0 : index
    %c0_5 = arith.constant 0 : index
    %c0_6 = arith.constant 0 : index
    %2 = vector.load %arg0[%c0_3, %c0_4, %c0_5, %c0_6] : memref<2x4x16x16xf32, #tpu.memory_space<vmem>>, vector<2x4x16x16xf32>
    %c0_7 = arith.constant 0 : index
    %c0_8 = arith.constant 0 : index
    %c1 = arith.constant 1 : index
    %c1_9 = arith.constant 1 : index
    %3 = vector.load %arg7[%c0_7, %c0_8, %c1, %c1_9] : memref<2x4x18x18xf32, #tpu.memory_space<vmem>>, vector<2x4x16x16xf32>
    tpu.vector_store %arg7[%c0_7, %c0_8, %c1, %c1_9], %2 {strides = array<i32>} : memref<2x4x18x18xf32, #tpu.memory_space<vmem>>, vector<2x4x16x16xf32>,
    %c0_10 = arith.constant 0 : index
    %c0_11 = arith.constant 0 : index
    %c0_12 = arith.constant 0 : index
    %c0_13 = arith.constant 0 : index
    %4 = vector.load %arg7[%c0_10, %c0_11, %c0_12, %c0_13] : memref<2x4x18x18xf32, #tpu.memory_space<vmem>>, vector<2x1x18x18xf32>
    %5 = vector.shape_cast %4 : vector<2x1x18x18xf32> to vector<2x18x18xf32>
    %6 = vector.extract_strided_slice %5 {offsets = [0, 0, 0], sizes = [2, 16, 16], strides = [1, 1, 1]} : vector<2x18x18xf32> to vector<2x16x16xf32>
    %c0_14 = arith.constant 0 : index
    %c0_15 = arith.constant 0 : index
    %7 = memref.load %arg1[%c0_14, %c0_15] : memref<4x9xf32, #tpu.memory_space<smem>>
    %8 = vector.broadcast %7 : f32 to vector<2x16x16xf32>
    %9 = arith.mulf %6, %8 : vector<2x16x16xf32>
    %10 = vector.extract_strided_slice %5 {offsets = [0, 0, 1], sizes = [2, 16, 16], strides = [1, 1, 1]} : vector<2x18x18xf32> to vector<2x16x16xf32>
    %c0_16 = arith.constant 0 : index
    %c1_17 = arith.constant 1 : index
    %11 = memref.load %arg1[%c0_16, %c1_17] : memref<4x9xf32, #tpu.memory_space<smem>>
    %12 = vector.broadcast %11 : f32 to vector<2x16x16xf32>
    %13 = arith.mulf %10, %12 : vector<2x16x16xf32>
    %14 = arith.addf %9, %13 : vector<2x16x16xf32>
    %15 = vector.extract_strided_slice %5 {offsets = [0, 0, 2], sizes = [2, 16, 16], strides = [1, 1, 1]} : vector<2x18x18xf32> to vector<2x16x16xf32>
    %c0_18 = arith.constant 0 : index
    %c2 = arith.constant 2 : index
    %16 = memref.load %arg1[%c0_18, %c2] : memref<4x9xf32, #tpu.memory_space<smem>>
    %17 = vector.broadcast %16 : f32 to vector<2x16x16xf32>
    %18 = arith.mulf %15, %17 : vector<2x16x16xf32>
    %19 = arith.addf %14, %18 : vector<2x16x16xf32>
    %20 = vector.extract_strided_slice %5 {offsets = [0, 1, 0], sizes = [2, 16, 16], strides = [1, 1, 1]} : vector<2x18x18xf32> to vector<2x16x16xf32>
    %c0_19 = arith.constant 0 : index
    %c3 = arith.constant 3 : index
    %21 = memref.load %arg1[%c0_19, %c3] : memref<4x9xf32, #tpu.memory_space<smem>>
    %22 = vector.broadcast %21 : f32 to vector<2x16x16xf32>
    %23 = arith.mulf %20, %22 : vector<2x16x16xf32>
    %24 = arith.addf %19, %23 : vector<2x16x16xf32>
    %25 = vector.extract_strided_slice %5 {offsets = [0, 1, 1], sizes = [2, 16, 16], strides = [1, 1, 1]} : vector<2x18x18xf32> to vector<2x16x16xf32>
    %c0_20 = arith.constant 0 : index
    %c4 = arith.constant 4 : index
    %26 = memref.load %arg1[%c0_20, %c4] : memref<4x9xf32, #tpu.memory_space<smem>>
    %27 = vector.broadcast %26 : f32 to vector<2x16x16xf32>
    %28 = arith.mulf %25, %27 : vector<2x16x16xf32>
    %29 = arith.addf %24, %28 : vector<2x16x16xf32>
    %30 = vector.extract_strided_slice %5 {offsets = [0, 1, 2], sizes = [2, 16, 16], strides = [1, 1, 1]} : vector<2x18x18xf32> to vector<2x16x16xf32>
    %c0_21 = arith.constant 0 : index
    %c5 = arith.constant 5 : index
    %31 = memref.load %arg1[%c0_21, %c5] : memref<4x9xf32, #tpu.memory_space<smem>>
    %32 = vector.broadcast %31 : f32 to vector<2x16x16xf32>
    %33 = arith.mulf %30, %32 : vector<2x16x16xf32>
    %34 = arith.addf %29, %33 : vector<2x16x16xf32>
    %35 = vector.extract_strided_slice %5 {offsets = [0, 2, 0], sizes = [2, 16, 16], strides = [1, 1, 1]} : vector<2x18x18xf32> to vector<2x16x16xf32>
    %c0_22 = arith.constant 0 : index
    %c6 = arith.constant 6 : index
    %36 = memref.load %arg1[%c0_22, %c6] : memref<4x9xf32, #tpu.memory_space<smem>>
    %37 = vector.broadcast %36 : f32 to vector<2x16x16xf32>
    %38 = arith.mulf %35, %37 : vector<2x16x16xf32>
    %39 = arith.addf %34, %38 : vector<2x16x16xf32>
    %40 = vector.extract_strided_slice %5 {offsets = [0, 2, 1], sizes = [2, 16, 16], strides = [1, 1, 1]} : vector<2x18x18xf32> to vector<2x16x16xf32>
    %c0_23 = arith.constant 0 : index
    %c7 = arith.constant 7 : index
    %41 = memref.load %arg1[%c0_23, %c7] : memref<4x9xf32, #tpu.memory_space<smem>>
    %42 = vector.broadcast %41 : f32 to vector<2x16x16xf32>
    %43 = arith.mulf %40, %42 : vector<2x16x16xf32>
    %44 = arith.addf %39, %43 : vector<2x16x16xf32>
    %45 = vector.extract_strided_slice %5 {offsets = [0, 2, 2], sizes = [2, 16, 16], strides = [1, 1, 1]} : vector<2x18x18xf32> to vector<2x16x16xf32>
    %c0_24 = arith.constant 0 : index
    %c8 = arith.constant 8 : index
    %46 = memref.load %arg1[%c0_24, %c8] : memref<4x9xf32, #tpu.memory_space<smem>>
    %47 = vector.broadcast %46 : f32 to vector<2x16x16xf32>
    %48 = arith.mulf %45, %47 : vector<2x16x16xf32>
    %49 = arith.addf %44, %48 : vector<2x16x16xf32>
    %c0_25 = arith.constant 0 : index
    %c1_26 = arith.constant 1 : index
    %c0_27 = arith.constant 0 : index
    %c0_28 = arith.constant 0 : index
    %50 = vector.load %arg7[%c0_25, %c1_26, %c0_27, %c0_28] : memref<2x4x18x18xf32, #tpu.memory_space<vmem>>, vector<2x1x18x18xf32>
    %51 = vector.shape_cast %50 : vector<2x1x18x18xf32> to vector<2x18x18xf32>
    %52 = vector.extract_strided_slice %51 {offsets = [0, 0, 0], sizes = [2, 16, 16], strides = [1, 1, 1]} : vector<2x18x18xf32> to vector<2x16x16xf32>
    %c1_29 = arith.constant 1 : index
    %c0_30 = arith.constant 0 : index
    %53 = memref.load %arg1[%c1_29, %c0_30] : memref<4x9xf32, #tpu.memory_space<smem>>
    %54 = vector.broadcast %53 : f32 to vector<2x16x16xf32>
    %55 = arith.mulf %52, %54 : vector<2x16x16xf32>
    %56 = vector.extract_strided_slice %51 {offsets = [0, 0, 1], sizes = [2, 16, 16], strides = [1, 1, 1]} : vector<2x18x18xf32> to vector<2x16x16xf32>
    %c1_31 = arith.constant 1 : index
    %c1_32 = arith.constant 1 : index
    %57 = memref.load %arg1[%c1_31, %c1_32] : memref<4x9xf32, #tpu.memory_space<smem>>
    %58 = vector.broadcast %57 : f32 to vector<2x16x16xf32>
    %59 = arith.mulf %56, %58 : vector<2x16x16xf32>
    %60 = arith.addf %55, %59 : vector<2x16x16xf32>
    %61 = vector.extract_strided_slice %51 {offsets = [0, 0, 2], sizes = [2, 16, 16], strides = [1, 1, 1]} : vector<2x18x18xf32> to vector<2x16x16xf32>
    %c1_33 = arith.constant 1 : index
    %c2_34 = arith.constant 2 : index
    %62 = memref.load %arg1[%c1_33, %c2_34] : memref<4x9xf32, #tpu.memory_space<smem>>
    %63 = vector.broadcast %62 : f32 to vector<2x16x16xf32>
    %64 = arith.mulf %61, %63 : vector<2x16x16xf32>
    %65 = arith.addf %60, %64 : vector<2x16x16xf32>
    %66 = vector.extract_strided_slice %51 {offsets = [0, 1, 0], sizes = [2, 16, 16], strides = [1, 1, 1]} : vector<2x18x18xf32> to vector<2x16x16xf32>
    %c1_35 = arith.constant 1 : index
    %c3_36 = arith.constant 3 : index
    %67 = memref.load %arg1[%c1_35, %c3_36] : memref<4x9xf32, #tpu.memory_space<smem>>
    %68 = vector.broadcast %67 : f32 to vector<2x16x16xf32>
    %69 = arith.mulf %66, %68 : vector<2x16x16xf32>
    %70 = arith.addf %65, %69 : vector<2x16x16xf32>
    %71 = vector.extract_strided_slice %51 {offsets = [0, 1, 1], sizes = [2, 16, 16], strides = [1, 1, 1]} : vector<2x18x18xf32> to vector<2x16x16xf32>
    %c1_37 = arith.constant 1 : index
    %c4_38 = arith.constant 4 : index
    %72 = memref.load %arg1[%c1_37, %c4_38] : memref<4x9xf32, #tpu.memory_space<smem>>
    %73 = vector.broadcast %72 : f32 to vector<2x16x16xf32>
    %74 = arith.mulf %71, %73 : vector<2x16x16xf32>
    %75 = arith.addf %70, %74 : vector<2x16x16xf32>
    %76 = vector.extract_strided_slice %51 {offsets = [0, 1, 2], sizes = [2, 16, 16], strides = [1, 1, 1]} : vector<2x18x18xf32> to vector<2x16x16xf32>
    %c1_39 = arith.constant 1 : index
    %c5_40 = arith.constant 5 : index
    %77 = memref.load %arg1[%c1_39, %c5_40] : memref<4x9xf32, #tpu.memory_space<smem>>
    %78 = vector.broadcast %77 : f32 to vector<2x16x16xf32>
    %79 = arith.mulf %76, %78 : vector<2x16x16xf32>
    %80 = arith.addf %75, %79 : vector<2x16x16xf32>
    %81 = vector.extract_strided_slice %51 {offsets = [0, 2, 0], sizes = [2, 16, 16], strides = [1, 1, 1]} : vector<2x18x18xf32> to vector<2x16x16xf32>
    %c1_41 = arith.constant 1 : index
    %c6_42 = arith.constant 6 : index
    %82 = memref.load %arg1[%c1_41, %c6_42] : memref<4x9xf32, #tpu.memory_space<smem>>
    %83 = vector.broadcast %82 : f32 to vector<2x16x16xf32>
    %84 = arith.mulf %81, %83 : vector<2x16x16xf32>
    %85 = arith.addf %80, %84 : vector<2x16x16xf32>
    %86 = vector.extract_strided_slice %51 {offsets = [0, 2, 1], sizes = [2, 16, 16], strides = [1, 1, 1]} : vector<2x18x18xf32> to vector<2x16x16xf32>
    %c1_43 = arith.constant 1 : index
    %c7_44 = arith.constant 7 : index
    %87 = memref.load %arg1[%c1_43, %c7_44] : memref<4x9xf32, #tpu.memory_space<smem>>
    %88 = vector.broadcast %87 : f32 to vector<2x16x16xf32>
    %89 = arith.mulf %86, %88 : vector<2x16x16xf32>
    %90 = arith.addf %85, %89 : vector<2x16x16xf32>
    %91 = vector.extract_strided_slice %51 {offsets = [0, 2, 2], sizes = [2, 16, 16], strides = [1, 1, 1]} : vector<2x18x18xf32> to vector<2x16x16xf32>
    %c1_45 = arith.constant 1 : index
    %c8_46 = arith.constant 8 : index
    %92 = memref.load %arg1[%c1_45, %c8_46] : memref<4x9xf32, #tpu.memory_space<smem>>
    %93 = vector.broadcast %92 : f32 to vector<2x16x16xf32>
    %94 = arith.mulf %91, %93 : vector<2x16x16xf32>
    %95 = arith.addf %90, %94 : vector<2x16x16xf32>
    %c0_47 = arith.constant 0 : index
    %c2_48 = arith.constant 2 : index
    %c0_49 = arith.constant 0 : index
    %c0_50 = arith.constant 0 : index
    %96 = vector.load %arg7[%c0_47, %c2_48, %c0_49, %c0_50] : memref<2x4x18x18xf32, #tpu.memory_space<vmem>>, vector<2x1x18x18xf32>
    %97 = vector.shape_cast %96 : vector<2x1x18x18xf32> to vector<2x18x18xf32>
    %98 = vector.extract_strided_slice %97 {offsets = [0, 0, 0], sizes = [2, 16, 16], strides = [1, 1, 1]} : vector<2x18x18xf32> to vector<2x16x16xf32>
    %c2_51 = arith.constant 2 : index
    %c0_52 = arith.constant 0 : index
    %99 = memref.load %arg1[%c2_51, %c0_52] : memref<4x9xf32, #tpu.memory_space<smem>>
    %100 = vector.broadcast %99 : f32 to vector<2x16x16xf32>
    %101 = arith.mulf %98, %100 : vector<2x16x16xf32>
    %102 = vector.extract_strided_slice %97 {offsets = [0, 0, 1], sizes = [2, 16, 16], strides = [1, 1, 1]} : vector<2x18x18xf32> to vector<2x16x16xf32>
    %c2_53 = arith.constant 2 : index
    %c1_54 = arith.constant 1 : index
    %103 = memref.load %arg1[%c2_53, %c1_54] : memref<4x9xf32, #tpu.memory_space<smem>>
    %104 = vector.broadcast %103 : f32 to vector<2x16x16xf32>
    %105 = arith.mulf %102, %104 : vector<2x16x16xf32>
    %106 = arith.addf %101, %105 : vector<2x16x16xf32>
    %107 = vector.extract_strided_slice %97 {offsets = [0, 0, 2], sizes = [2, 16, 16], strides = [1, 1, 1]} : vector<2x18x18xf32> to vector<2x16x16xf32>
    %c2_55 = arith.constant 2 : index
    %c2_56 = arith.constant 2 : index
    %108 = memref.load %arg1[%c2_55, %c2_56] : memref<4x9xf32, #tpu.memory_space<smem>>
    %109 = vector.broadcast %108 : f32 to vector<2x16x16xf32>
    %110 = arith.mulf %107, %109 : vector<2x16x16xf32>
    %111 = arith.addf %106, %110 : vector<2x16x16xf32>
    %112 = vector.extract_strided_slice %97 {offsets = [0, 1, 0], sizes = [2, 16, 16], strides = [1, 1, 1]} : vector<2x18x18xf32> to vector<2x16x16xf32>
    %c2_57 = arith.constant 2 : index
    %c3_58 = arith.constant 3 : index
    %113 = memref.load %arg1[%c2_57, %c3_58] : memref<4x9xf32, #tpu.memory_space<smem>>
    %114 = vector.broadcast %113 : f32 to vector<2x16x16xf32>
    %115 = arith.mulf %112, %114 : vector<2x16x16xf32>
    %116 = arith.addf %111, %115 : vector<2x16x16xf32>
    %117 = vector.extract_strided_slice %97 {offsets = [0, 1, 1], sizes = [2, 16, 16], strides = [1, 1, 1]} : vector<2x18x18xf32> to vector<2x16x16xf32>
    %c2_59 = arith.constant 2 : index
    %c4_60 = arith.constant 4 : index
    %118 = memref.load %arg1[%c2_59, %c4_60] : memref<4x9xf32, #tpu.memory_space<smem>>
    %119 = vector.broadcast %118 : f32 to vector<2x16x16xf32>
    %120 = arith.mulf %117, %119 : vector<2x16x16xf32>
    %121 = arith.addf %116, %120 : vector<2x16x16xf32>
    %122 = vector.extract_strided_slice %97 {offsets = [0, 1, 2], sizes = [2, 16, 16], strides = [1, 1, 1]} : vector<2x18x18xf32> to vector<2x16x16xf32>
    %c2_61 = arith.constant 2 : index
    %c5_62 = arith.constant 5 : index
    %123 = memref.load %arg1[%c2_61, %c5_62] : memref<4x9xf32, #tpu.memory_space<smem>>
    %124 = vector.broadcast %123 : f32 to vector<2x16x16xf32>
    %125 = arith.mulf %122, %124 : vector<2x16x16xf32>
    %126 = arith.addf %121, %125 : vector<2x16x16xf32>
    %127 = vector.extract_strided_slice %97 {offsets = [0, 2, 0], sizes = [2, 16, 16], strides = [1, 1, 1]} : vector<2x18x18xf32> to vector<2x16x16xf32>
    %c2_63 = arith.constant 2 : index
    %c6_64 = arith.constant 6 : index
    %128 = memref.load %arg1[%c2_63, %c6_64] : memref<4x9xf32, #tpu.memory_space<smem>>
    %129 = vector.broadcast %128 : f32 to vector<2x16x16xf32>
    %130 = arith.mulf %127, %129 : vector<2x16x16xf32>
    %131 = arith.addf %126, %130 : vector<2x16x16xf32>
    %132 = vector.extract_strided_slice %97 {offsets = [0, 2, 1], sizes = [2, 16, 16], strides = [1, 1, 1]} : vector<2x18x18xf32> to vector<2x16x16xf32>
    %c2_65 = arith.constant 2 : index
    %c7_66 = arith.constant 7 : index
    %133 = memref.load %arg1[%c2_65, %c7_66] : memref<4x9xf32, #tpu.memory_space<smem>>
    %134 = vector.broadcast %133 : f32 to vector<2x16x16xf32>
    %135 = arith.mulf %132, %134 : vector<2x16x16xf32>
    %136 = arith.addf %131, %135 : vector<2x16x16xf32>
    %137 = vector.extract_strided_slice %97 {offsets = [0, 2, 2], sizes = [2, 16, 16], strides = [1, 1, 1]} : vector<2x18x18xf32> to vector<2x16x16xf32>
    %c2_67 = arith.constant 2 : index
    %c8_68 = arith.constant 8 : index
    %138 = memref.load %arg1[%c2_67, %c8_68] : memref<4x9xf32, #tpu.memory_space<smem>>
    %139 = vector.broadcast %138 : f32 to vector<2x16x16xf32>
    %140 = arith.mulf %137, %139 : vector<2x16x16xf32>
    %141 = arith.addf %136, %140 : vector<2x16x16xf32>
    %c0_69 = arith.constant 0 : index
    %c3_70 = arith.constant 3 : index
    %c0_71 = arith.constant 0 : index
    %c0_72 = arith.constant 0 : index
    %142 = vector.load %arg7[%c0_69, %c3_70, %c0_71, %c0_72] : memref<2x4x18x18xf32, #tpu.memory_space<vmem>>, vector<2x1x18x18xf32>
    %143 = vector.shape_cast %142 : vector<2x1x18x18xf32> to vector<2x18x18xf32>
    %144 = vector.extract_strided_slice %143 {offsets = [0, 0, 0], sizes = [2, 16, 16], strides = [1, 1, 1]} : vector<2x18x18xf32> to vector<2x16x16xf32>
    %c3_73 = arith.constant 3 : index
    %c0_74 = arith.constant 0 : index
    %145 = memref.load %arg1[%c3_73, %c0_74] : memref<4x9xf32, #tpu.memory_space<smem>>
    %146 = vector.broadcast %145 : f32 to vector<2x16x16xf32>
    %147 = arith.mulf %144, %146 : vector<2x16x16xf32>
    %148 = vector.extract_strided_slice %143 {offsets = [0, 0, 1], sizes = [2, 16, 16], strides = [1, 1, 1]} : vector<2x18x18xf32> to vector<2x16x16xf32>
    %c3_75 = arith.constant 3 : index
    %c1_76 = arith.constant 1 : index
    %149 = memref.load %arg1[%c3_75, %c1_76] : memref<4x9xf32, #tpu.memory_space<smem>>
    %150 = vector.broadcast %149 : f32 to vector<2x16x16xf32>
    %151 = arith.mulf %148, %150 : vector<2x16x16xf32>
    %152 = arith.addf %147, %151 : vector<2x16x16xf32>
    %153 = vector.extract_strided_slice %143 {offsets = [0, 0, 2], sizes = [2, 16, 16], strides = [1, 1, 1]} : vector<2x18x18xf32> to vector<2x16x16xf32>
    %c3_77 = arith.constant 3 : index
    %c2_78 = arith.constant 2 : index
    %154 = memref.load %arg1[%c3_77, %c2_78] : memref<4x9xf32, #tpu.memory_space<smem>>
    %155 = vector.broadcast %154 : f32 to vector<2x16x16xf32>
    %156 = arith.mulf %153, %155 : vector<2x16x16xf32>
    %157 = arith.addf %152, %156 : vector<2x16x16xf32>
    %158 = vector.extract_strided_slice %143 {offsets = [0, 1, 0], sizes = [2, 16, 16], strides = [1, 1, 1]} : vector<2x18x18xf32> to vector<2x16x16xf32>
    %c3_79 = arith.constant 3 : index
    %c3_80 = arith.constant 3 : index
    %159 = memref.load %arg1[%c3_79, %c3_80] : memref<4x9xf32, #tpu.memory_space<smem>>
    %160 = vector.broadcast %159 : f32 to vector<2x16x16xf32>
    %161 = arith.mulf %158, %160 : vector<2x16x16xf32>
    %162 = arith.addf %157, %161 : vector<2x16x16xf32>
    %163 = vector.extract_strided_slice %143 {offsets = [0, 1, 1], sizes = [2, 16, 16], strides = [1, 1, 1]} : vector<2x18x18xf32> to vector<2x16x16xf32>
    %c3_81 = arith.constant 3 : index
    %c4_82 = arith.constant 4 : index
    %164 = memref.load %arg1[%c3_81, %c4_82] : memref<4x9xf32, #tpu.memory_space<smem>>
    %165 = vector.broadcast %164 : f32 to vector<2x16x16xf32>
    %166 = arith.mulf %163, %165 : vector<2x16x16xf32>
    %167 = arith.addf %162, %166 : vector<2x16x16xf32>
    %168 = vector.extract_strided_slice %143 {offsets = [0, 1, 2], sizes = [2, 16, 16], strides = [1, 1, 1]} : vector<2x18x18xf32> to vector<2x16x16xf32>
    %c3_83 = arith.constant 3 : index
    %c5_84 = arith.constant 5 : index
    %169 = memref.load %arg1[%c3_83, %c5_84] : memref<4x9xf32, #tpu.memory_space<smem>>
    %170 = vector.broadcast %169 : f32 to vector<2x16x16xf32>
    %171 = arith.mulf %168, %170 : vector<2x16x16xf32>
    %172 = arith.addf %167, %171 : vector<2x16x16xf32>
    %173 = vector.extract_strided_slice %143 {offsets = [0, 2, 0], sizes = [2, 16, 16], strides = [1, 1, 1]} : vector<2x18x18xf32> to vector<2x16x16xf32>
    %c3_85 = arith.constant 3 : index
    %c6_86 = arith.constant 6 : index
    %174 = memref.load %arg1[%c3_85, %c6_86] : memref<4x9xf32, #tpu.memory_space<smem>>
    %175 = vector.broadcast %174 : f32 to vector<2x16x16xf32>
    %176 = arith.mulf %173, %175 : vector<2x16x16xf32>
    %177 = arith.addf %172, %176 : vector<2x16x16xf32>
    %178 = vector.extract_strided_slice %143 {offsets = [0, 2, 1], sizes = [2, 16, 16], strides = [1, 1, 1]} : vector<2x18x18xf32> to vector<2x16x16xf32>
    %c3_87 = arith.constant 3 : index
    %c7_88 = arith.constant 7 : index
    %179 = memref.load %arg1[%c3_87, %c7_88] : memref<4x9xf32, #tpu.memory_space<smem>>
    %180 = vector.broadcast %179 : f32 to vector<2x16x16xf32>
    %181 = arith.mulf %178, %180 : vector<2x16x16xf32>
    %182 = arith.addf %177, %181 : vector<2x16x16xf32>
    %183 = vector.extract_strided_slice %143 {offsets = [0, 2, 2], sizes = [2, 16, 16], strides = [1, 1, 1]} : vector<2x18x18xf32> to vector<2x16x16xf32>
    %c3_89 = arith.constant 3 : index
    %c8_90 = arith.constant 8 : index
    %184 = memref.load %arg1[%c3_89, %c8_90] : memref<4x9xf32, #tpu.memory_space<smem>>
    %185 = vector.broadcast %184 : f32 to vector<2x16x16xf32>
    %186 = arith.mulf %183, %185 : vector<2x16x16xf32>
    %187 = arith.addf %182, %186 : vector<2x16x16xf32>
    %c0_91 = arith.constant 0 : index
    %c0_92 = arith.constant 0 : index
    %188 = memref.load %arg2[%c0_91, %c0_92] : memref<8x4xf32, #tpu.memory_space<smem>>
    %189 = vector.broadcast %188 : f32 to vector<2x16x16xf32>
    %190 = arith.mulf %49, %189 : vector<2x16x16xf32>
    %c0_93 = arith.constant 0 : index
    %c1_94 = arith.constant 1 : index
    %191 = memref.load %arg2[%c0_93, %c1_94] : memref<8x4xf32, #tpu.memory_space<smem>>
    %192 = vector.broadcast %191 : f32 to vector<2x16x16xf32>
    %193 = arith.mulf %95, %192 : vector<2x16x16xf32>
    %194 = arith.addf %190, %193 : vector<2x16x16xf32>
    %c0_95 = arith.constant 0 : index
    %c2_96 = arith.constant 2 : index
    %195 = memref.load %arg2[%c0_95, %c2_96] : memref<8x4xf32, #tpu.memory_space<smem>>
    %196 = vector.broadcast %195 : f32 to vector<2x16x16xf32>
    %197 = arith.mulf %141, %196 : vector<2x16x16xf32>
    %198 = arith.addf %194, %197 : vector<2x16x16xf32>
    %c0_97 = arith.constant 0 : index
    %c3_98 = arith.constant 3 : index
    %199 = memref.load %arg2[%c0_97, %c3_98] : memref<8x4xf32, #tpu.memory_space<smem>>
    %200 = vector.broadcast %199 : f32 to vector<2x16x16xf32>
    %201 = arith.mulf %187, %200 : vector<2x16x16xf32>
    %202 = arith.addf %198, %201 : vector<2x16x16xf32>
    %203 = vector.shape_cast %202 : vector<2x16x16xf32> to vector<1x2x16x16xf32>
    %cst_99 = arith.constant dense<0.000000e+00> : vector<1xf32>
    %204 = vector.multi_reduction <add>, %203, %cst_99 [1, 2, 3] : vector<1x2x16x16xf32> to vector<1xf32>
    %205 = vector.shape_cast %204 : vector<1xf32> to vector<1x1x1x1xf32>
    %206 = vector.extract %205[0, 0, 0, 0] : f32 from vector<1x1x1x1xf32>
    %cst_100 = arith.constant 0.001953125 : f32
    %207 = arith.mulf %206, %cst_100 : f32
    %208 = vector.broadcast %207 : f32 to vector<2x16x16xf32>
    %209 = arith.subf %202, %208 : vector<2x16x16xf32>
    %210 = arith.mulf %209, %209 : vector<2x16x16xf32>
    %211 = vector.shape_cast %210 : vector<2x16x16xf32> to vector<1x2x16x16xf32>
    %cst_101 = arith.constant dense<0.000000e+00> : vector<1xf32>
    %212 = vector.multi_reduction <add>, %211, %cst_101 [1, 2, 3] : vector<1x2x16x16xf32> to vector<1xf32>
    %213 = vector.shape_cast %212 : vector<1xf32> to vector<1x1x1x1xf32>
    %214 = vector.extract %213[0, 0, 0, 0] : f32 from vector<1x1x1x1xf32>
    %cst_102 = arith.constant 0.001953125 : f32
    %215 = arith.mulf %214, %cst_102 : f32
    %c0_103 = arith.constant 0 : index
    %216 = memref.load %arg3[%c0_103] : memref<8xf32, #tpu.memory_space<smem>>
    %cst_104 = arith.constant 9.99999974E-6 : f32
    %217 = arith.addf %215, %cst_104 : f32
    %218 = math.rsqrt %217 : f32
    %219 = arith.mulf %216, %218 : f32
    %220 = vector.broadcast %219 : f32 to vector<2x16x16xf32>
    %221 = arith.mulf %209, %220 : vector<2x16x16xf32>
    %c0_105 = arith.constant 0 : index
    %222 = memref.load %arg4[%c0_105] : memref<8xf32, #tpu.memory_space<smem>>
    %223 = vector.broadcast %222 : f32 to vector<2x16x16xf32>
    %224 = arith.addf %221, %223 : vector<2x16x16xf32>
    %cst_106 = arith.constant 0.000000e+00 : f32
    %225 = vector.broadcast %cst_106 : f32 to vector<2x16x16xf32>
    %226 = arith.cmpf oge, %224, %225 : vector<2x16x16xf32>
    %c0_107 = arith.constant 0 : index
    %227 = memref.load %arg5[%c0_107] : memref<8xf32, #tpu.memory_space<smem>>
    %228 = vector.broadcast %227 : f32 to vector<2x16x16xf32>
    %229 = arith.mulf %224, %228 : vector<2x16x16xf32>
    %230 = arith.select %226, %224, %229 : vector<2x16x16xi1>, vector<2x16x16xf32>
    %c0_108 = arith.constant 0 : index
    %c0_109 = arith.constant 0 : index
    %c0_110 = arith.constant 0 : index
    %c0_111 = arith.constant 0 : index
    %231 = vector.load %arg6[%c0_108, %c0_109, %c0_110, %c0_111] : memref<2x8x16x16xf32, #tpu.memory_space<vmem>>, vector<2x1x16x16xf32>
    %232 = vector.shape_cast %231 : vector<2x1x16x16xf32> to vector<2x16x16xf32>
    %233 = vector.shape_cast %230 : vector<2x16x16xf32> to vector<2x1x16x16xf32>
    tpu.vector_store %arg6[%c0_108, %c0_109, %c0_110, %c0_111], %233 {strides = array<i32>} : memref<2x8x16x16xf32, #tpu.memory_space<vmem>>, vector<2x1x16x16xf32>,
    %c1_112 = arith.constant 1 : index
    %c0_113 = arith.constant 0 : index
    %234 = memref.load %arg2[%c1_112, %c0_113] : memref<8x4xf32, #tpu.memory_space<smem>>
    %235 = vector.broadcast %234 : f32 to vector<2x16x16xf32>
    %236 = arith.mulf %49, %235 : vector<2x16x16xf32>
    %c1_114 = arith.constant 1 : index
    %c1_115 = arith.constant 1 : index
    %237 = memref.load %arg2[%c1_114, %c1_115] : memref<8x4xf32, #tpu.memory_space<smem>>
    %238 = vector.broadcast %237 : f32 to vector<2x16x16xf32>
    %239 = arith.mulf %95, %238 : vector<2x16x16xf32>
    %240 = arith.addf %236, %239 : vector<2x16x16xf32>
    %c1_116 = arith.constant 1 : index
    %c2_117 = arith.constant 2 : index
    %241 = memref.load %arg2[%c1_116, %c2_117] : memref<8x4xf32, #tpu.memory_space<smem>>
    %242 = vector.broadcast %241 : f32 to vector<2x16x16xf32>
    %243 = arith.mulf %141, %242 : vector<2x16x16xf32>
    %244 = arith.addf %240, %243 : vector<2x16x16xf32>
    %c1_118 = arith.constant 1 : index
    %c3_119 = arith.constant 3 : index
    %245 = memref.load %arg2[%c1_118, %c3_119] : memref<8x4xf32, #tpu.memory_space<smem>>
    %246 = vector.broadcast %245 : f32 to vector<2x16x16xf32>
    %247 = arith.mulf %187, %246 : vector<2x16x16xf32>
    %248 = arith.addf %244, %247 : vector<2x16x16xf32>
    %249 = vector.shape_cast %248 : vector<2x16x16xf32> to vector<1x2x16x16xf32>
    %cst_120 = arith.constant dense<0.000000e+00> : vector<1xf32>
    %250 = vector.multi_reduction <add>, %249, %cst_120 [1, 2, 3] : vector<1x2x16x16xf32> to vector<1xf32>
    %251 = vector.shape_cast %250 : vector<1xf32> to vector<1x1x1x1xf32>
    %252 = vector.extract %251[0, 0, 0, 0] : f32 from vector<1x1x1x1xf32>
    %cst_121 = arith.constant 0.001953125 : f32
    %253 = arith.mulf %252, %cst_121 : f32
    %254 = vector.broadcast %253 : f32 to vector<2x16x16xf32>
    %255 = arith.subf %248, %254 : vector<2x16x16xf32>
    %256 = arith.mulf %255, %255 : vector<2x16x16xf32>
    %257 = vector.shape_cast %256 : vector<2x16x16xf32> to vector<1x2x16x16xf32>
    %cst_122 = arith.constant dense<0.000000e+00> : vector<1xf32>
    %258 = vector.multi_reduction <add>, %257, %cst_122 [1, 2, 3] : vector<1x2x16x16xf32> to vector<1xf32>
    %259 = vector.shape_cast %258 : vector<1xf32> to vector<1x1x1x1xf32>
    %260 = vector.extract %259[0, 0, 0, 0] : f32 from vector<1x1x1x1xf32>
    %cst_123 = arith.constant 0.001953125 : f32
    %261 = arith.mulf %260, %cst_123 : f32
    %c1_124 = arith.constant 1 : index
    %262 = memref.load %arg3[%c1_124] : memref<8xf32, #tpu.memory_space<smem>>
    %cst_125 = arith.constant 9.99999974E-6 : f32
    %263 = arith.addf %261, %cst_125 : f32
    %264 = math.rsqrt %263 : f32
    %265 = arith.mulf %262, %264 : f32
    %266 = vector.broadcast %265 : f32 to vector<2x16x16xf32>
    %267 = arith.mulf %255, %266 : vector<2x16x16xf32>
    %c1_126 = arith.constant 1 : index
    %268 = memref.load %arg4[%c1_126] : memref<8xf32, #tpu.memory_space<smem>>
    %269 = vector.broadcast %268 : f32 to vector<2x16x16xf32>
    %270 = arith.addf %267, %269 : vector<2x16x16xf32>
    %cst_127 = arith.constant 0.000000e+00 : f32
    %271 = vector.broadcast %cst_127 : f32 to vector<2x16x16xf32>
    %272 = arith.cmpf oge, %270, %271 : vector<2x16x16xf32>
    %c1_128 = arith.constant 1 : index
    %273 = memref.load %arg5[%c1_128] : memref<8xf32, #tpu.memory_space<smem>>
    %274 = vector.broadcast %273 : f32 to vector<2x16x16xf32>
    %275 = arith.mulf %270, %274 : vector<2x16x16xf32>
    %276 = arith.select %272, %270, %275 : vector<2x16x16xi1>, vector<2x16x16xf32>
    %c0_129 = arith.constant 0 : index
    %c1_130 = arith.constant 1 : index
    %c0_131 = arith.constant 0 : index
    %c0_132 = arith.constant 0 : index
    %277 = vector.load %arg6[%c0_129, %c1_130, %c0_131, %c0_132] : memref<2x8x16x16xf32, #tpu.memory_space<vmem>>, vector<2x1x16x16xf32>
    %278 = vector.shape_cast %277 : vector<2x1x16x16xf32> to vector<2x16x16xf32>
    %279 = vector.shape_cast %276 : vector<2x16x16xf32> to vector<2x1x16x16xf32>
    tpu.vector_store %arg6[%c0_129, %c1_130, %c0_131, %c0_132], %279 {strides = array<i32>} : memref<2x8x16x16xf32, #tpu.memory_space<vmem>>, vector<2x1x16x16xf32>,
    %c2_133 = arith.constant 2 : index
    %c0_134 = arith.constant 0 : index
    %280 = memref.load %arg2[%c2_133, %c0_134] : memref<8x4xf32, #tpu.memory_space<smem>>
    %281 = vector.broadcast %280 : f32 to vector<2x16x16xf32>
    %282 = arith.mulf %49, %281 : vector<2x16x16xf32>
    %c2_135 = arith.constant 2 : index
    %c1_136 = arith.constant 1 : index
    %283 = memref.load %arg2[%c2_135, %c1_136] : memref<8x4xf32, #tpu.memory_space<smem>>
    %284 = vector.broadcast %283 : f32 to vector<2x16x16xf32>
    %285 = arith.mulf %95, %284 : vector<2x16x16xf32>
    %286 = arith.addf %282, %285 : vector<2x16x16xf32>
    %c2_137 = arith.constant 2 : index
    %c2_138 = arith.constant 2 : index
    %287 = memref.load %arg2[%c2_137, %c2_138] : memref<8x4xf32, #tpu.memory_space<smem>>
    %288 = vector.broadcast %287 : f32 to vector<2x16x16xf32>
    %289 = arith.mulf %141, %288 : vector<2x16x16xf32>
    %290 = arith.addf %286, %289 : vector<2x16x16xf32>
    %c2_139 = arith.constant 2 : index
    %c3_140 = arith.constant 3 : index
    %291 = memref.load %arg2[%c2_139, %c3_140] : memref<8x4xf32, #tpu.memory_space<smem>>
    %292 = vector.broadcast %291 : f32 to vector<2x16x16xf32>
    %293 = arith.mulf %187, %292 : vector<2x16x16xf32>
    %294 = arith.addf %290, %293 : vector<2x16x16xf32>
    %295 = vector.shape_cast %294 : vector<2x16x16xf32> to vector<1x2x16x16xf32>
    %cst_141 = arith.constant dense<0.000000e+00> : vector<1xf32>
    %296 = vector.multi_reduction <add>, %295, %cst_141 [1, 2, 3] : vector<1x2x16x16xf32> to vector<1xf32>
    %297 = vector.shape_cast %296 : vector<1xf32> to vector<1x1x1x1xf32>
    %298 = vector.extract %297[0, 0, 0, 0] : f32 from vector<1x1x1x1xf32>
    %cst_142 = arith.constant 0.001953125 : f32
    %299 = arith.mulf %298, %cst_142 : f32
    %300 = vector.broadcast %299 : f32 to vector<2x16x16xf32>
    %301 = arith.subf %294, %300 : vector<2x16x16xf32>
    %302 = arith.mulf %301, %301 : vector<2x16x16xf32>
    %303 = vector.shape_cast %302 : vector<2x16x16xf32> to vector<1x2x16x16xf32>
    %cst_143 = arith.constant dense<0.000000e+00> : vector<1xf32>
    %304 = vector.multi_reduction <add>, %303, %cst_143 [1, 2, 3] : vector<1x2x16x16xf32> to vector<1xf32>
    %305 = vector.shape_cast %304 : vector<1xf32> to vector<1x1x1x1xf32>
    %306 = vector.extract %305[0, 0, 0, 0] : f32 from vector<1x1x1x1xf32>
    %cst_144 = arith.constant 0.001953125 : f32
    %307 = arith.mulf %306, %cst_144 : f32
    %c2_145 = arith.constant 2 : index
    %308 = memref.load %arg3[%c2_145] : memref<8xf32, #tpu.memory_space<smem>>
    %cst_146 = arith.constant 9.99999974E-6 : f32
    %309 = arith.addf %307, %cst_146 : f32
    %310 = math.rsqrt %309 : f32
    %311 = arith.mulf %308, %310 : f32
    %312 = vector.broadcast %311 : f32 to vector<2x16x16xf32>
    %313 = arith.mulf %301, %312 : vector<2x16x16xf32>
    %c2_147 = arith.constant 2 : index
    %314 = memref.load %arg4[%c2_147] : memref<8xf32, #tpu.memory_space<smem>>
    %315 = vector.broadcast %314 : f32 to vector<2x16x16xf32>
    %316 = arith.addf %313, %315 : vector<2x16x16xf32>
    %cst_148 = arith.constant 0.000000e+00 : f32
    %317 = vector.broadcast %cst_148 : f32 to vector<2x16x16xf32>
    %318 = arith.cmpf oge, %316, %317 : vector<2x16x16xf32>
    %c2_149 = arith.constant 2 : index
    %319 = memref.load %arg5[%c2_149] : memref<8xf32, #tpu.memory_space<smem>>
    %320 = vector.broadcast %319 : f32 to vector<2x16x16xf32>
    %321 = arith.mulf %316, %320 : vector<2x16x16xf32>
    %322 = arith.select %318, %316, %321 : vector<2x16x16xi1>, vector<2x16x16xf32>
    %c0_150 = arith.constant 0 : index
    %c2_151 = arith.constant 2 : index
    %c0_152 = arith.constant 0 : index
    %c0_153 = arith.constant 0 : index
    %323 = vector.load %arg6[%c0_150, %c2_151, %c0_152, %c0_153] : memref<2x8x16x16xf32, #tpu.memory_space<vmem>>, vector<2x1x16x16xf32>
    %324 = vector.shape_cast %323 : vector<2x1x16x16xf32> to vector<2x16x16xf32>
    %325 = vector.shape_cast %322 : vector<2x16x16xf32> to vector<2x1x16x16xf32>
    tpu.vector_store %arg6[%c0_150, %c2_151, %c0_152, %c0_153], %325 {strides = array<i32>} : memref<2x8x16x16xf32, #tpu.memory_space<vmem>>, vector<2x1x16x16xf32>,
    %c3_154 = arith.constant 3 : index
    %c0_155 = arith.constant 0 : index
    %326 = memref.load %arg2[%c3_154, %c0_155] : memref<8x4xf32, #tpu.memory_space<smem>>
    %327 = vector.broadcast %326 : f32 to vector<2x16x16xf32>
    %328 = arith.mulf %49, %327 : vector<2x16x16xf32>
    %c3_156 = arith.constant 3 : index
    %c1_157 = arith.constant 1 : index
    %329 = memref.load %arg2[%c3_156, %c1_157] : memref<8x4xf32, #tpu.memory_space<smem>>
    %330 = vector.broadcast %329 : f32 to vector<2x16x16xf32>
    %331 = arith.mulf %95, %330 : vector<2x16x16xf32>
    %332 = arith.addf %328, %331 : vector<2x16x16xf32>
    %c3_158 = arith.constant 3 : index
    %c2_159 = arith.constant 2 : index
    %333 = memref.load %arg2[%c3_158, %c2_159] : memref<8x4xf32, #tpu.memory_space<smem>>
    %334 = vector.broadcast %333 : f32 to vector<2x16x16xf32>
    %335 = arith.mulf %141, %334 : vector<2x16x16xf32>
    %336 = arith.addf %332, %335 : vector<2x16x16xf32>
    %c3_160 = arith.constant 3 : index
    %c3_161 = arith.constant 3 : index
    %337 = memref.load %arg2[%c3_160, %c3_161] : memref<8x4xf32, #tpu.memory_space<smem>>
    %338 = vector.broadcast %337 : f32 to vector<2x16x16xf32>
    %339 = arith.mulf %187, %338 : vector<2x16x16xf32>
    %340 = arith.addf %336, %339 : vector<2x16x16xf32>
    %341 = vector.shape_cast %340 : vector<2x16x16xf32> to vector<1x2x16x16xf32>
    %cst_162 = arith.constant dense<0.000000e+00> : vector<1xf32>
    %342 = vector.multi_reduction <add>, %341, %cst_162 [1, 2, 3] : vector<1x2x16x16xf32> to vector<1xf32>
    %343 = vector.shape_cast %342 : vector<1xf32> to vector<1x1x1x1xf32>
    %344 = vector.extract %343[0, 0, 0, 0] : f32 from vector<1x1x1x1xf32>
    %cst_163 = arith.constant 0.001953125 : f32
    %345 = arith.mulf %344, %cst_163 : f32
    %346 = vector.broadcast %345 : f32 to vector<2x16x16xf32>
    %347 = arith.subf %340, %346 : vector<2x16x16xf32>
    %348 = arith.mulf %347, %347 : vector<2x16x16xf32>
    %349 = vector.shape_cast %348 : vector<2x16x16xf32> to vector<1x2x16x16xf32>
    %cst_164 = arith.constant dense<0.000000e+00> : vector<1xf32>
    %350 = vector.multi_reduction <add>, %349, %cst_164 [1, 2, 3] : vector<1x2x16x16xf32> to vector<1xf32>
    %351 = vector.shape_cast %350 : vector<1xf32> to vector<1x1x1x1xf32>
    %352 = vector.extract %351[0, 0, 0, 0] : f32 from vector<1x1x1x1xf32>
    %cst_165 = arith.constant 0.001953125 : f32
    %353 = arith.mulf %352, %cst_165 : f32
    %c3_166 = arith.constant 3 : index
    %354 = memref.load %arg3[%c3_166] : memref<8xf32, #tpu.memory_space<smem>>
    %cst_167 = arith.constant 9.99999974E-6 : f32
    %355 = arith.addf %353, %cst_167 : f32
    %356 = math.rsqrt %355 : f32
    %357 = arith.mulf %354, %356 : f32
    %358 = vector.broadcast %357 : f32 to vector<2x16x16xf32>
    %359 = arith.mulf %347, %358 : vector<2x16x16xf32>
    %c3_168 = arith.constant 3 : index
    %360 = memref.load %arg4[%c3_168] : memref<8xf32, #tpu.memory_space<smem>>
    %361 = vector.broadcast %360 : f32 to vector<2x16x16xf32>
    %362 = arith.addf %359, %361 : vector<2x16x16xf32>
    %cst_169 = arith.constant 0.000000e+00 : f32
    %363 = vector.broadcast %cst_169 : f32 to vector<2x16x16xf32>
    %364 = arith.cmpf oge, %362, %363 : vector<2x16x16xf32>
    %c3_170 = arith.constant 3 : index
    %365 = memref.load %arg5[%c3_170] : memref<8xf32, #tpu.memory_space<smem>>
    %366 = vector.broadcast %365 : f32 to vector<2x16x16xf32>
    %367 = arith.mulf %362, %366 : vector<2x16x16xf32>
    %368 = arith.select %364, %362, %367 : vector<2x16x16xi1>, vector<2x16x16xf32>
    %c0_171 = arith.constant 0 : index
    %c3_172 = arith.constant 3 : index
    %c0_173 = arith.constant 0 : index
    %c0_174 = arith.constant 0 : index
    %369 = vector.load %arg6[%c0_171, %c3_172, %c0_173, %c0_174] : memref<2x8x16x16xf32, #tpu.memory_space<vmem>>, vector<2x1x16x16xf32>
    %370 = vector.shape_cast %369 : vector<2x1x16x16xf32> to vector<2x16x16xf32>
    %371 = vector.shape_cast %368 : vector<2x16x16xf32> to vector<2x1x16x16xf32>
    tpu.vector_store %arg6[%c0_171, %c3_172, %c0_173, %c0_174], %371 {strides = array<i32>} : memref<2x8x16x16xf32, #tpu.memory_space<vmem>>, vector<2x1x16x16xf32>,
    %c4_175 = arith.constant 4 : index
    %c0_176 = arith.constant 0 : index
    %372 = memref.load %arg2[%c4_175, %c0_176] : memref<8x4xf32, #tpu.memory_space<smem>>
    %373 = vector.broadcast %372 : f32 to vector<2x16x16xf32>
    %374 = arith.mulf %49, %373 : vector<2x16x16xf32>
    %c4_177 = arith.constant 4 : index
    %c1_178 = arith.constant 1 : index
    %375 = memref.load %arg2[%c4_177, %c1_178] : memref<8x4xf32, #tpu.memory_space<smem>>
    %376 = vector.broadcast %375 : f32 to vector<2x16x16xf32>
    %377 = arith.mulf %95, %376 : vector<2x16x16xf32>
    %378 = arith.addf %374, %377 : vector<2x16x16xf32>
    %c4_179 = arith.constant 4 : index
    %c2_180 = arith.constant 2 : index
    %379 = memref.load %arg2[%c4_179, %c2_180] : memref<8x4xf32, #tpu.memory_space<smem>>
    %380 = vector.broadcast %379 : f32 to vector<2x16x16xf32>
    %381 = arith.mulf %141, %380 : vector<2x16x16xf32>
    %382 = arith.addf %378, %381 : vector<2x16x16xf32>
    %c4_181 = arith.constant 4 : index
    %c3_182 = arith.constant 3 : index
    %383 = memref.load %arg2[%c4_181, %c3_182] : memref<8x4xf32, #tpu.memory_space<smem>>
    %384 = vector.broadcast %383 : f32 to vector<2x16x16xf32>
    %385 = arith.mulf %187, %384 : vector<2x16x16xf32>
    %386 = arith.addf %382, %385 : vector<2x16x16xf32>
    %387 = vector.shape_cast %386 : vector<2x16x16xf32> to vector<1x2x16x16xf32>
    %cst_183 = arith.constant dense<0.000000e+00> : vector<1xf32>
    %388 = vector.multi_reduction <add>, %387, %cst_183 [1, 2, 3] : vector<1x2x16x16xf32> to vector<1xf32>
    %389 = vector.shape_cast %388 : vector<1xf32> to vector<1x1x1x1xf32>
    %390 = vector.extract %389[0, 0, 0, 0] : f32 from vector<1x1x1x1xf32>
    %cst_184 = arith.constant 0.001953125 : f32
    %391 = arith.mulf %390, %cst_184 : f32
    %392 = vector.broadcast %391 : f32 to vector<2x16x16xf32>
    %393 = arith.subf %386, %392 : vector<2x16x16xf32>
    %394 = arith.mulf %393, %393 : vector<2x16x16xf32>
    %395 = vector.shape_cast %394 : vector<2x16x16xf32> to vector<1x2x16x16xf32>
    %cst_185 = arith.constant dense<0.000000e+00> : vector<1xf32>
    %396 = vector.multi_reduction <add>, %395, %cst_185 [1, 2, 3] : vector<1x2x16x16xf32> to vector<1xf32>
    %397 = vector.shape_cast %396 : vector<1xf32> to vector<1x1x1x1xf32>
    %398 = vector.extract %397[0, 0, 0, 0] : f32 from vector<1x1x1x1xf32>
    %cst_186 = arith.constant 0.001953125 : f32
    %399 = arith.mulf %398, %cst_186 : f32
    %c4_187 = arith.constant 4 : index
    %400 = memref.load %arg3[%c4_187] : memref<8xf32, #tpu.memory_space<smem>>
    %cst_188 = arith.constant 9.99999974E-6 : f32
    %401 = arith.addf %399, %cst_188 : f32
    %402 = math.rsqrt %401 : f32
    %403 = arith.mulf %400, %402 : f32
    %404 = vector.broadcast %403 : f32 to vector<2x16x16xf32>
    %405 = arith.mulf %393, %404 : vector<2x16x16xf32>
    %c4_189 = arith.constant 4 : index
    %406 = memref.load %arg4[%c4_189] : memref<8xf32, #tpu.memory_space<smem>>
    %407 = vector.broadcast %406 : f32 to vector<2x16x16xf32>
    %408 = arith.addf %405, %407 : vector<2x16x16xf32>
    %cst_190 = arith.constant 0.000000e+00 : f32
    %409 = vector.broadcast %cst_190 : f32 to vector<2x16x16xf32>
    %410 = arith.cmpf oge, %408, %409 : vector<2x16x16xf32>
    %c4_191 = arith.constant 4 : index
    %411 = memref.load %arg5[%c4_191] : memref<8xf32, #tpu.memory_space<smem>>
    %412 = vector.broadcast %411 : f32 to vector<2x16x16xf32>
    %413 = arith.mulf %408, %412 : vector<2x16x16xf32>
    %414 = arith.select %410, %408, %413 : vector<2x16x16xi1>, vector<2x16x16xf32>
    %c0_192 = arith.constant 0 : index
    %c4_193 = arith.constant 4 : index
    %c0_194 = arith.constant 0 : index
    %c0_195 = arith.constant 0 : index
    %415 = vector.load %arg6[%c0_192, %c4_193, %c0_194, %c0_195] : memref<2x8x16x16xf32, #tpu.memory_space<vmem>>, vector<2x1x16x16xf32>
    %416 = vector.shape_cast %415 : vector<2x1x16x16xf32> to vector<2x16x16xf32>
    %417 = vector.shape_cast %414 : vector<2x16x16xf32> to vector<2x1x16x16xf32>
    tpu.vector_store %arg6[%c0_192, %c4_193, %c0_194, %c0_195], %417 {strides = array<i32>} : memref<2x8x16x16xf32, #tpu.memory_space<vmem>>, vector<2x1x16x16xf32>,
    %c5_196 = arith.constant 5 : index
    %c0_197 = arith.constant 0 : index
    %418 = memref.load %arg2[%c5_196, %c0_197] : memref<8x4xf32, #tpu.memory_space<smem>>
    %419 = vector.broadcast %418 : f32 to vector<2x16x16xf32>
    %420 = arith.mulf %49, %419 : vector<2x16x16xf32>
    %c5_198 = arith.constant 5 : index
    %c1_199 = arith.constant 1 : index
    %421 = memref.load %arg2[%c5_198, %c1_199] : memref<8x4xf32, #tpu.memory_space<smem>>
    %422 = vector.broadcast %421 : f32 to vector<2x16x16xf32>
    %423 = arith.mulf %95, %422 : vector<2x16x16xf32>
    %424 = arith.addf %420, %423 : vector<2x16x16xf32>
    %c5_200 = arith.constant 5 : index
    %c2_201 = arith.constant 2 : index
    %425 = memref.load %arg2[%c5_200, %c2_201] : memref<8x4xf32, #tpu.memory_space<smem>>
    %426 = vector.broadcast %425 : f32 to vector<2x16x16xf32>
    %427 = arith.mulf %141, %426 : vector<2x16x16xf32>
    %428 = arith.addf %424, %427 : vector<2x16x16xf32>
    %c5_202 = arith.constant 5 : index
    %c3_203 = arith.constant 3 : index
    %429 = memref.load %arg2[%c5_202, %c3_203] : memref<8x4xf32, #tpu.memory_space<smem>>
    %430 = vector.broadcast %429 : f32 to vector<2x16x16xf32>
    %431 = arith.mulf %187, %430 : vector<2x16x16xf32>
    %432 = arith.addf %428, %431 : vector<2x16x16xf32>
    %433 = vector.shape_cast %432 : vector<2x16x16xf32> to vector<1x2x16x16xf32>
    %cst_204 = arith.constant dense<0.000000e+00> : vector<1xf32>
    %434 = vector.multi_reduction <add>, %433, %cst_204 [1, 2, 3] : vector<1x2x16x16xf32> to vector<1xf32>
    %435 = vector.shape_cast %434 : vector<1xf32> to vector<1x1x1x1xf32>
    %436 = vector.extract %435[0, 0, 0, 0] : f32 from vector<1x1x1x1xf32>
    %cst_205 = arith.constant 0.001953125 : f32
    %437 = arith.mulf %436, %cst_205 : f32
    %438 = vector.broadcast %437 : f32 to vector<2x16x16xf32>
    %439 = arith.subf %432, %438 : vector<2x16x16xf32>
    %440 = arith.mulf %439, %439 : vector<2x16x16xf32>
    %441 = vector.shape_cast %440 : vector<2x16x16xf32> to vector<1x2x16x16xf32>
    %cst_206 = arith.constant dense<0.000000e+00> : vector<1xf32>
    %442 = vector.multi_reduction <add>, %441, %cst_206 [1, 2, 3] : vector<1x2x16x16xf32> to vector<1xf32>
    %443 = vector.shape_cast %442 : vector<1xf32> to vector<1x1x1x1xf32>
    %444 = vector.extract %443[0, 0, 0, 0] : f32 from vector<1x1x1x1xf32>
    %cst_207 = arith.constant 0.001953125 : f32
    %445 = arith.mulf %444, %cst_207 : f32
    %c5_208 = arith.constant 5 : index
    %446 = memref.load %arg3[%c5_208] : memref<8xf32, #tpu.memory_space<smem>>
    %cst_209 = arith.constant 9.99999974E-6 : f32
    %447 = arith.addf %445, %cst_209 : f32
    %448 = math.rsqrt %447 : f32
    %449 = arith.mulf %446, %448 : f32
    %450 = vector.broadcast %449 : f32 to vector<2x16x16xf32>
    %451 = arith.mulf %439, %450 : vector<2x16x16xf32>
    %c5_210 = arith.constant 5 : index
    %452 = memref.load %arg4[%c5_210] : memref<8xf32, #tpu.memory_space<smem>>
    %453 = vector.broadcast %452 : f32 to vector<2x16x16xf32>
    %454 = arith.addf %451, %453 : vector<2x16x16xf32>
    %cst_211 = arith.constant 0.000000e+00 : f32
    %455 = vector.broadcast %cst_211 : f32 to vector<2x16x16xf32>
    %456 = arith.cmpf oge, %454, %455 : vector<2x16x16xf32>
    %c5_212 = arith.constant 5 : index
    %457 = memref.load %arg5[%c5_212] : memref<8xf32, #tpu.memory_space<smem>>
    %458 = vector.broadcast %457 : f32 to vector<2x16x16xf32>
    %459 = arith.mulf %454, %458 : vector<2x16x16xf32>
    %460 = arith.select %456, %454, %459 : vector<2x16x16xi1>, vector<2x16x16xf32>
    %c0_213 = arith.constant 0 : index
    %c5_214 = arith.constant 5 : index
    %c0_215 = arith.constant 0 : index
    %c0_216 = arith.constant 0 : index
    %461 = vector.load %arg6[%c0_213, %c5_214, %c0_215, %c0_216] : memref<2x8x16x16xf32, #tpu.memory_space<vmem>>, vector<2x1x16x16xf32>
    %462 = vector.shape_cast %461 : vector<2x1x16x16xf32> to vector<2x16x16xf32>
    %463 = vector.shape_cast %460 : vector<2x16x16xf32> to vector<2x1x16x16xf32>
    tpu.vector_store %arg6[%c0_213, %c5_214, %c0_215, %c0_216], %463 {strides = array<i32>} : memref<2x8x16x16xf32, #tpu.memory_space<vmem>>, vector<2x1x16x16xf32>,
    %c6_217 = arith.constant 6 : index
    %c0_218 = arith.constant 0 : index
    %464 = memref.load %arg2[%c6_217, %c0_218] : memref<8x4xf32, #tpu.memory_space<smem>>
    %465 = vector.broadcast %464 : f32 to vector<2x16x16xf32>
    %466 = arith.mulf %49, %465 : vector<2x16x16xf32>
    %c6_219 = arith.constant 6 : index
    %c1_220 = arith.constant 1 : index
    %467 = memref.load %arg2[%c6_219, %c1_220] : memref<8x4xf32, #tpu.memory_space<smem>>
    %468 = vector.broadcast %467 : f32 to vector<2x16x16xf32>
    %469 = arith.mulf %95, %468 : vector<2x16x16xf32>
    %470 = arith.addf %466, %469 : vector<2x16x16xf32>
    %c6_221 = arith.constant 6 : index
    %c2_222 = arith.constant 2 : index
    %471 = memref.load %arg2[%c6_221, %c2_222] : memref<8x4xf32, #tpu.memory_space<smem>>
    %472 = vector.broadcast %471 : f32 to vector<2x16x16xf32>
    %473 = arith.mulf %141, %472 : vector<2x16x16xf32>
    %474 = arith.addf %470, %473 : vector<2x16x16xf32>
    %c6_223 = arith.constant 6 : index
    %c3_224 = arith.constant 3 : index
    %475 = memref.load %arg2[%c6_223, %c3_224] : memref<8x4xf32, #tpu.memory_space<smem>>
    %476 = vector.broadcast %475 : f32 to vector<2x16x16xf32>
    %477 = arith.mulf %187, %476 : vector<2x16x16xf32>
    %478 = arith.addf %474, %477 : vector<2x16x16xf32>
    %479 = vector.shape_cast %478 : vector<2x16x16xf32> to vector<1x2x16x16xf32>
    %cst_225 = arith.constant dense<0.000000e+00> : vector<1xf32>
    %480 = vector.multi_reduction <add>, %479, %cst_225 [1, 2, 3] : vector<1x2x16x16xf32> to vector<1xf32>
    %481 = vector.shape_cast %480 : vector<1xf32> to vector<1x1x1x1xf32>
    %482 = vector.extract %481[0, 0, 0, 0] : f32 from vector<1x1x1x1xf32>
    %cst_226 = arith.constant 0.001953125 : f32
    %483 = arith.mulf %482, %cst_226 : f32
    %484 = vector.broadcast %483 : f32 to vector<2x16x16xf32>
    %485 = arith.subf %478, %484 : vector<2x16x16xf32>
    %486 = arith.mulf %485, %485 : vector<2x16x16xf32>
    %487 = vector.shape_cast %486 : vector<2x16x16xf32> to vector<1x2x16x16xf32>
    %cst_227 = arith.constant dense<0.000000e+00> : vector<1xf32>
    %488 = vector.multi_reduction <add>, %487, %cst_227 [1, 2, 3] : vector<1x2x16x16xf32> to vector<1xf32>
    %489 = vector.shape_cast %488 : vector<1xf32> to vector<1x1x1x1xf32>
    %490 = vector.extract %489[0, 0, 0, 0] : f32 from vector<1x1x1x1xf32>
    %cst_228 = arith.constant 0.001953125 : f32
    %491 = arith.mulf %490, %cst_228 : f32
    %c6_229 = arith.constant 6 : index
    %492 = memref.load %arg3[%c6_229] : memref<8xf32, #tpu.memory_space<smem>>
    %cst_230 = arith.constant 9.99999974E-6 : f32
    %493 = arith.addf %491, %cst_230 : f32
    %494 = math.rsqrt %493 : f32
    %495 = arith.mulf %492, %494 : f32
    %496 = vector.broadcast %495 : f32 to vector<2x16x16xf32>
    %497 = arith.mulf %485, %496 : vector<2x16x16xf32>
    %c6_231 = arith.constant 6 : index
    %498 = memref.load %arg4[%c6_231] : memref<8xf32, #tpu.memory_space<smem>>
    %499 = vector.broadcast %498 : f32 to vector<2x16x16xf32>
    %500 = arith.addf %497, %499 : vector<2x16x16xf32>
    %cst_232 = arith.constant 0.000000e+00 : f32
    %501 = vector.broadcast %cst_232 : f32 to vector<2x16x16xf32>
    %502 = arith.cmpf oge, %500, %501 : vector<2x16x16xf32>
    %c6_233 = arith.constant 6 : index
    %503 = memref.load %arg5[%c6_233] : memref<8xf32, #tpu.memory_space<smem>>
    %504 = vector.broadcast %503 : f32 to vector<2x16x16xf32>
    %505 = arith.mulf %500, %504 : vector<2x16x16xf32>
    %506 = arith.select %502, %500, %505 : vector<2x16x16xi1>, vector<2x16x16xf32>
    %c0_234 = arith.constant 0 : index
    %c6_235 = arith.constant 6 : index
    %c0_236 = arith.constant 0 : index
    %c0_237 = arith.constant 0 : index
    %507 = vector.load %arg6[%c0_234, %c6_235, %c0_236, %c0_237] : memref<2x8x16x16xf32, #tpu.memory_space<vmem>>, vector<2x1x16x16xf32>
    %508 = vector.shape_cast %507 : vector<2x1x16x16xf32> to vector<2x16x16xf32>
    %509 = vector.shape_cast %506 : vector<2x16x16xf32> to vector<2x1x16x16xf32>
    tpu.vector_store %arg6[%c0_234, %c6_235, %c0_236, %c0_237], %509 {strides = array<i32>} : memref<2x8x16x16xf32, #tpu.memory_space<vmem>>, vector<2x1x16x16xf32>,
    %c7_238 = arith.constant 7 : index
    %c0_239 = arith.constant 0 : index
    %510 = memref.load %arg2[%c7_238, %c0_239] : memref<8x4xf32, #tpu.memory_space<smem>>
    %511 = vector.broadcast %510 : f32 to vector<2x16x16xf32>
    %512 = arith.mulf %49, %511 : vector<2x16x16xf32>
    %c7_240 = arith.constant 7 : index
    %c1_241 = arith.constant 1 : index
    %513 = memref.load %arg2[%c7_240, %c1_241] : memref<8x4xf32, #tpu.memory_space<smem>>
    %514 = vector.broadcast %513 : f32 to vector<2x16x16xf32>
    %515 = arith.mulf %95, %514 : vector<2x16x16xf32>
    %516 = arith.addf %512, %515 : vector<2x16x16xf32>
    %c7_242 = arith.constant 7 : index
    %c2_243 = arith.constant 2 : index
    %517 = memref.load %arg2[%c7_242, %c2_243] : memref<8x4xf32, #tpu.memory_space<smem>>
    %518 = vector.broadcast %517 : f32 to vector<2x16x16xf32>
    %519 = arith.mulf %141, %518 : vector<2x16x16xf32>
    %520 = arith.addf %516, %519 : vector<2x16x16xf32>
    %c7_244 = arith.constant 7 : index
    %c3_245 = arith.constant 3 : index
    %521 = memref.load %arg2[%c7_244, %c3_245] : memref<8x4xf32, #tpu.memory_space<smem>>
    %522 = vector.broadcast %521 : f32 to vector<2x16x16xf32>
    %523 = arith.mulf %187, %522 : vector<2x16x16xf32>
    %524 = arith.addf %520, %523 : vector<2x16x16xf32>
    %525 = vector.shape_cast %524 : vector<2x16x16xf32> to vector<1x2x16x16xf32>
    %cst_246 = arith.constant dense<0.000000e+00> : vector<1xf32>
    %526 = vector.multi_reduction <add>, %525, %cst_246 [1, 2, 3] : vector<1x2x16x16xf32> to vector<1xf32>
    %527 = vector.shape_cast %526 : vector<1xf32> to vector<1x1x1x1xf32>
    %528 = vector.extract %527[0, 0, 0, 0] : f32 from vector<1x1x1x1xf32>
    %cst_247 = arith.constant 0.001953125 : f32
    %529 = arith.mulf %528, %cst_247 : f32
    %530 = vector.broadcast %529 : f32 to vector<2x16x16xf32>
    %531 = arith.subf %524, %530 : vector<2x16x16xf32>
    %532 = arith.mulf %531, %531 : vector<2x16x16xf32>
    %533 = vector.shape_cast %532 : vector<2x16x16xf32> to vector<1x2x16x16xf32>
    %cst_248 = arith.constant dense<0.000000e+00> : vector<1xf32>
    %534 = vector.multi_reduction <add>, %533, %cst_248 [1, 2, 3] : vector<1x2x16x16xf32> to vector<1xf32>
    %535 = vector.shape_cast %534 : vector<1xf32> to vector<1x1x1x1xf32>
    %536 = vector.extract %535[0, 0, 0, 0] : f32 from vector<1x1x1x1xf32>
    %cst_249 = arith.constant 0.001953125 : f32
    %537 = arith.mulf %536, %cst_249 : f32
    %c7_250 = arith.constant 7 : index
    %538 = memref.load %arg3[%c7_250] : memref<8xf32, #tpu.memory_space<smem>>
    %cst_251 = arith.constant 9.99999974E-6 : f32
    %539 = arith.addf %537, %cst_251 : f32
    %540 = math.rsqrt %539 : f32
    %541 = arith.mulf %538, %540 : f32
    %542 = vector.broadcast %541 : f32 to vector<2x16x16xf32>
    %543 = arith.mulf %531, %542 : vector<2x16x16xf32>
    %c7_252 = arith.constant 7 : index
    %544 = memref.load %arg4[%c7_252] : memref<8xf32, #tpu.memory_space<smem>>
    %545 = vector.broadcast %544 : f32 to vector<2x16x16xf32>
    %546 = arith.addf %543, %545 : vector<2x16x16xf32>
    %cst_253 = arith.constant 0.000000e+00 : f32
    %547 = vector.broadcast %cst_253 : f32 to vector<2x16x16xf32>
    %548 = arith.cmpf oge, %546, %547 : vector<2x16x16xf32>
    %c7_254 = arith.constant 7 : index
    %549 = memref.load %arg5[%c7_254] : memref<8xf32, #tpu.memory_space<smem>>
    %550 = vector.broadcast %549 : f32 to vector<2x16x16xf32>
    %551 = arith.mulf %546, %550 : vector<2x16x16xf32>
    %552 = arith.select %548, %546, %551 : vector<2x16x16xi1>, vector<2x16x16xf32>
    %c0_255 = arith.constant 0 : index
    %c7_256 = arith.constant 7 : index
    %c0_257 = arith.constant 0 : index
    %c0_258 = arith.constant 0 : index
    %553 = vector.load %arg6[%c0_255, %c7_256, %c0_257, %c0_258] : memref<2x8x16x16xf32, #tpu.memory_space<vmem>>, vector<2x1x16x16xf32>
    %554 = vector.shape_cast %553 : vector<2x1x16x16xf32> to vector<2x16x16xf32>
    %555 = vector.shape_cast %552 : vector<2x16x16xf32> to vector<2x1x16x16xf32>
    tpu.vector_store %arg6[%c0_255, %c7_256, %c0_257, %c0_258], %555 {strides = array<i32>} : memref<2x8x16x16xf32, #tpu.memory_space<vmem>>, vector<2x1x16x16xf32>,
    return
  }
}

</mosaic_0001>

<llo_original>
// kernel: tpu_custom_call.1
$region0: #{tpu_custom_call.1}
  #allocation0 [shape = 'u32[]', space=smem, size = 0x4, offset = 0x4, fixed_abs, tag = 'smem constant byte address 0x4 - core index']
  #allocation1 [shape = 'u32[72,128]{1,0:T(1,128)}', space=vmem, size = 0x9000, scoped, tag = 'internal scratch']
  #allocation2 [shape = 'f32[2,4,18,18]{3,2,1,0:T(8,128)}', space=vmem, size = 0x18000, scoped, tag = 'scratch operand']
  %s0 = inlined_call_operand.hbm [shape: f32[2,4,16,16], index: 0, kind: input, shape index: {}]
  %s1 = inlined_call_operand.vmem [shape: f32[4,9], index: 1, kind: input, shape index: {}]
  %s2 = inlined_call_operand.vmem [shape: f32[8,4], index: 2, kind: input, shape index: {}]
  %s3 = inlined_call_operand.vmem [shape: f32[8], index: 3, kind: input, shape index: {}]
  %s4 = inlined_call_operand.vmem [shape: f32[8], index: 4, kind: input, shape index: {}]
  %s5 = inlined_call_operand.vmem [shape: f32[8], index: 5, kind: input, shape index: {}]
  %s6 = inlined_call_operand.hbm [shape: f32[2,8,16,16], index: 6, kind: output, shape index: {}]
  %s7 = sld [smem:[#allocation0]]
  $region58: #{tpu_custom_call.1} parent=0
    _
  %s9 = ssub.s32 1, %s7
  %s10 = scalar_select 0, %s9, %s7
  $region1: #{tpu_custom_call.1} parent=0
    #allocation3 [shape = 'u8[65536]{0}', space=vmem, size = 0x10000, scoped, tag = 'input window, operand 0, single buffered']
    #allocation4 [shape = 's32[1]{0}', space=sflag, size = 0x4, scoped, tag = 'scoped memory for tpu_custom_call.1']
    #allocation5 [shape = 's32[1]{0}', space=sflag, size = 0x4, scoped, tag = 'scoped memory for tpu_custom_call.1']
    #allocation6 [shape = 's32[1]{0}', space=sflag, size = 0x4, scoped, tag = 'scoped memory for tpu_custom_call.1']
    #allocation7 [shape = 'u8[2048]{0}', space=smem, size = 0x800, scoped, tag = 'input window, operand 1, single buffered']
    #allocation8 [shape = 'u8[4096]{0}', space=smem, size = 0x1000, scoped, tag = 'input window, operand 2, single buffered']
    #allocation9 [shape = 's32[1]{0}', space=sflag, size = 0x4, scoped, tag = 'scoped memory for tpu_custom_call.1']
    #allocation10 [shape = 'u8[512]{0}', space=smem, size = 0x200, scoped, tag = 'input window, operand 3, single buffered']
    #allocation11 [shape = 'u8[512]{0}', space=smem, size = 0x200, scoped, tag = 'input window, operand 4, single buffered']
    #allocation12 [shape = 's32[1]{0}', space=sflag, size = 0x4, scoped, tag = 'scoped memory for tpu_custom_call.1']
    #allocation13 [shape = 'u8[512]{0}', space=smem, size = 0x200, scoped, tag = 'input window, operand 5, single buffered']
    #allocation14 [shape = 'u8[131072]{0}', space=vmem, size = 0x20000, scoped, tag = 'output window, operand 0, single buffered']
    %11 = vsyncpa [#allocation4], 0
    %12 = vsyncpa [#allocation6], 0
    %13 = vsyncpa [#allocation9], 0
    %14 = vsyncpa [#allocation12], 0
    %15 = vsyncpa [#allocation5], 0
    // Predicated region
    $region2: #{tpu_custom_call.1} parent=1 // pred_check
      _
    $region3: #{tpu_custom_call.1} parent=1 // pred_check_branch
      %17 = sbr.rel (0) target = $region5
    $region4: #{tpu_custom_call.1} parent=1 // pred_region
      %19 = vsyncadd [#allocation4], 0
      %s20 = sshll.u32 %s0, 4
      %s21 = int_to_ptr.hbm [resolvable:$true] %s20
      %s22 = sshll.u32 [#allocation3], 4
      %s23 = int_to_ptr.vmem [resolvable:$true] %s22
      %28 = dma.hbm_to_vmem [thread:$0]  %s21, 2048, %s23, [#allocation4], 128, 128, 8
    $region5: #{tpu_custom_call.1} parent=1 // pred_fallthru
      _
    // Predicated region
    $region6: #{tpu_custom_call.1} parent=1 // pred_check
      _
    $region7: #{tpu_custom_call.1} parent=1 // pred_check_branch
      %30 = sbr.rel (0) target = $region9
    $region8: #{tpu_custom_call.1} parent=1 // pred_region
      %32 = vsyncadd [#allocation6], 0
      %s34 = sshll.u32 %s1, 4
      %s35 = int_to_ptr.vmem [resolvable:$true] %s34
      %37 = dma.vmem_to_smem %s35, 64, [#allocation7], [#allocation6]
    $region9: #{tpu_custom_call.1} parent=1 // pred_fallthru
      _
    // Predicated region
    $region10: #{tpu_custom_call.1} parent=1 // pred_check
      _
    $region11: #{tpu_custom_call.1} parent=1 // pred_check_branch
      %39 = sbr.rel (0) target = $region13
    $region12: #{tpu_custom_call.1} parent=1 // pred_region
      %41 = vsyncadd [#allocation9], 0
      %s43 = sshll.u32 %s2, 4
      %s44 = int_to_ptr.vmem [resolvable:$true] %s43
      %46 = dma.vmem_to_smem %s44, 128, [#allocation8], [#allocation9]
    $region13: #{tpu_custom_call.1} parent=1 // pred_fallthru
      _
    // Predicated region
    $region14: #{tpu_custom_call.1} parent=1 // pred_check
      _
    $region15: #{tpu_custom_call.1} parent=1 // pred_check_branch
      %48 = sbr.rel (0) target = $region17
    $region16: #{tpu_custom_call.1} parent=1 // pred_region
      %50 = vsyncadd [#allocation9], 0
      %s52 = sshll.u32 %s3, 4
      %s53 = int_to_ptr.vmem [resolvable:$true] %s52
      %55 = dma.vmem_to_smem %s53, 16, [#allocation10], [#allocation9]
    $region17: #{tpu_custom_call.1} parent=1 // pred_fallthru
      _
    // Predicated region
    $region18: #{tpu_custom_call.1} parent=1 // pred_check
      _
    $region19: #{tpu_custom_call.1} parent=1 // pred_check_branch
      %57 = sbr.rel (0) target = $region21
    $region20: #{tpu_custom_call.1} parent=1 // pred_region
      %59 = vsyncadd [#allocation12], 0
      %s61 = sshll.u32 %s4, 4
      %s62 = int_to_ptr.vmem [resolvable:$true] %s61
      %64 = dma.vmem_to_smem %s62, 16, [#allocation11], [#allocation12]
    $region21: #{tpu_custom_call.1} parent=1 // pred_fallthru
      _
    // Predicated region
    $region22: #{tpu_custom_call.1} parent=1 // pred_check
      _
    $region23: #{tpu_custom_call.1} parent=1 // pred_check_branch
      %66 = sbr.rel (0) target = $region25
    $region24: #{tpu_custom_call.1} parent=1 // pred_region
      %68 = vsyncadd [#allocation12], 0
      %s70 = sshll.u32 %s5, 4
      %s71 = int_to_ptr.vmem [resolvable:$true] %s70
      %73 = dma.vmem_to_smem %s71, 16, [#allocation13], [#allocation12]
    $region25: #{tpu_custom_call.1} parent=1 // pred_fallthru
      _
    // Predicated region
    $region26: #{tpu_custom_call.1} parent=1 // pred_check
      _
    $region27: #{tpu_custom_call.1} parent=1 // pred_check_branch
      %75 = sbr.rel (0) target = $region29
    $region28: #{tpu_custom_call.1} parent=1 // pred_region
      %77 = dma.done [#allocation4], 2048
    $region29: #{tpu_custom_call.1} parent=1 // pred_fallthru
      _
    // Predicated region
    $region30: #{tpu_custom_call.1} parent=1 // pred_check
      _
    $region31: #{tpu_custom_call.1} parent=1 // pred_check_branch
      %79 = sbr.rel (0) target = $region33
    $region32: #{tpu_custom_call.1} parent=1 // pred_region
      %81 = dma.done [#allocation6], 64
    $region33: #{tpu_custom_call.1} parent=1 // pred_fallthru
      _
    // Predicated region
    $region34: #{tpu_custom_call.1} parent=1 // pred_check
      _
    $region35: #{tpu_custom_call.1} parent=1 // pred_check_branch
      %83 = sbr.rel (0) target = $region37
    $region36: #{tpu_custom_call.1} parent=1 // pred_region
      %85 = dma.done [#allocation9], 128
    $region37: #{tpu_custom_call.1} parent=1 // pred_fallthru
      _
    // Predicated region
    $region38: #{tpu_custom_call.1} parent=1 // pred_check
      _
    $region39: #{tpu_custom_call.1} parent=1 // pred_check_branch
      %87 = sbr.rel (0) target = $region41
    $region40: #{tpu_custom_call.1} parent=1 // pred_region
      %89 = dma.done [#allocation9], 16
    $region41: #{tpu_custom_call.1} parent=1 // pred_fallthru
      _
    // Predicated region
    $region42: #{tpu_custom_call.1} parent=1 // pred_check
      _
    $region43: #{tpu_custom_call.1} parent=1 // pred_check_branch
      %91 = sbr.rel (0) target = $region45
    $region44: #{tpu_custom_call.1} parent=1 // pred_region
      %93 = dma.done [#allocation12], 16
    $region45: #{tpu_custom_call.1} parent=1 // pred_fallthru
      _
    // Predicated region
    $region46: #{tpu_custom_call.1} parent=1 // pred_check
      _
    $region47: #{tpu_custom_call.1} parent=1 // pred_check_branch
      %95 = sbr.rel (0) target = $region49
    $region48: #{tpu_custom_call.1} parent=1 // pred_region
      %97 = dma.done [#allocation12], 16
    $region49: #{tpu_custom_call.1} parent=1 // pred_fallthru
      _
    %98 = sfence
    %vm99 = vcmask 146432
    %100 = vst.msk [vmem:[#allocation2] sm:$0xff] %vm99, 0.0
    %101 = vst.msk [vmem:[#allocation2 + $0x8] sm:$0xff] %vm99, 0.0
    %vm102 = vcmask 140288
    %103 = vst.msk [vmem:[#allocation2 + $0x10] sm:$0x3] %vm102, 0.0
    %104 = vst.msk [vmem:[#allocation2 + $0x18] sm:$0xff] %vm99, 0.0
    %105 = vst.msk [vmem:[#allocation2 + $0x20] sm:$0xff] %vm99, 0.0
    %106 = vst.msk [vmem:[#allocation2 + $0x28] sm:$0x3] %vm102, 0.0
    %107 = vst.msk [vmem:[#allocation2 + $0x30] sm:$0xff] %vm99, 0.0
    %108 = vst.msk [vmem:[#allocation2 + $0x38] sm:$0xff] %vm99, 0.0
    %109 = vst.msk [vmem:[#allocation2 + $0x40] sm:$0x3] %vm102, 0.0
    %110 = vst.msk [vmem:[#allocation2 + $0x48] sm:$0xff] %vm99, 0.0
    %111 = vst.msk [vmem:[#allocation2 + $0x50] sm:$0xff] %vm99, 0.0
    %112 = vst.msk [vmem:[#allocation2 + $0x58] sm:$0x3] %vm102, 0.0
    %113 = vst.msk [vmem:[#allocation2 + $0x60] sm:$0xff] %vm99, 0.0
    %114 = vst.msk [vmem:[#allocation2 + $0x68] sm:$0xff] %vm99, 0.0
    %115 = vst.msk [vmem:[#allocation2 + $0x70] sm:$0x3] %vm102, 0.0
    %116 = vst.msk [vmem:[#allocation2 + $0x78] sm:$0xff] %vm99, 0.0
    %117 = vst.msk [vmem:[#allocation2 + $0x80] sm:$0xff] %vm99, 0.0
    %118 = vst.msk [vmem:[#allocation2 + $0x88] sm:$0x3] %vm102, 0.0
    %119 = vst.msk [vmem:[#allocation2 + $0x90] sm:$0xff] %vm99, 0.0
    %120 = vst.msk [vmem:[#allocation2 + $0x98] sm:$0xff] %vm99, 0.0
    %121 = vst.msk [vmem:[#allocation2 + $0xa0] sm:$0x3] %vm102, 0.0
    %122 = vst.msk [vmem:[#allocation2 + $0xa8] sm:$0xff] %vm99, 0.0
    %123 = vst.msk [vmem:[#allocation2 + $0xb0] sm:$0xff] %vm99, 0.0
    %124 = vst.msk [vmem:[#allocation2 + $0xb8] sm:$0x3] %vm102, 0.0
    %v125 = vld [vmem:[#allocation3] sm:$0xff]
    %v126 = vld [vmem:[#allocation3 + $0x8] sm:$0xff]
    %v127 = vld [vmem:[#allocation3 + $0x10] sm:$0xff]
    %v128 = vld [vmem:[#allocation3 + $0x18] sm:$0xff]
    %v129 = vld [vmem:[#allocation3 + $0x20] sm:$0xff]
    %v130 = vld [vmem:[#allocation3 + $0x28] sm:$0xff]
    %v131 = vld [vmem:[#allocation3 + $0x30] sm:$0xff]
    %v132 = vld [vmem:[#allocation3 + $0x38] sm:$0xff]
    %v133 = vld [vmem:[#allocation3 + $0x40] sm:$0xff]
    %v134 = vld [vmem:[#allocation3 + $0x48] sm:$0xff]
    %v135 = vld [vmem:[#allocation3 + $0x50] sm:$0xff]
    %v136 = vld [vmem:[#allocation3 + $0x58] sm:$0xff]
    %v137 = vld [vmem:[#allocation3 + $0x60] sm:$0xff]
    %v138 = vld [vmem:[#allocation3 + $0x68] sm:$0xff]
    %v139 = vld [vmem:[#allocation3 + $0x70] sm:$0xff]
    %v140 = vld [vmem:[#allocation3 + $0x78] sm:$0xff]
    %157 = vrot.lane.b32.xlu0 %v125, 1
    %v158 = vpop.permute.xlu0 %157
    %159 = vrot.lane.b32.xlu0 %v126, 1
    %v160 = vpop.permute.xlu0 %159
    %161 = vrot.lane.b32.xlu0 %v127, 1
    %v162 = vpop.permute.xlu0 %161
    %163 = vrot.lane.b32.xlu0 %v128, 1
    %v164 = vpop.permute.xlu0 %163
    %165 = vrot.lane.b32.xlu0 %v129, 1
    %v166 = vpop.permute.xlu0 %165
    %167 = vrot.lane.b32.xlu0 %v130, 1
    %v168 = vpop.permute.xlu0 %167
    %169 = vrot.lane.b32.xlu0 %v131, 1
    %v170 = vpop.permute.xlu0 %169
    %171 = vrot.lane.b32.xlu0 %v132, 1
    %v172 = vpop.permute.xlu0 %171
    %173 = vrot.lane.b32.xlu0 %v133, 1
    %v174 = vpop.permute.xlu0 %173
    %175 = vrot.lane.b32.xlu0 %v134, 1
    %v176 = vpop.permute.xlu0 %175
    %177 = vrot.lane.b32.xlu0 %v135, 1
    %v178 = vpop.permute.xlu0 %177
    %179 = vrot.lane.b32.xlu0 %v136, 1
    %v180 = vpop.permute.xlu0 %179
    %181 = vrot.lane.b32.xlu0 %v137, 1
    %v182 = vpop.permute.xlu0 %181
    %183 = vrot.lane.b32.xlu0 %v138, 1
    %v184 = vpop.permute.xlu0 %183
    %185 = vrot.lane.b32.xlu0 %v139, 1
    %v186 = vpop.permute.xlu0 %185
    %187 = vrot.lane.b32.xlu0 %v140, 1
    %v188 = vpop.permute.xlu0 %187
    %vm205 = vcmask 138248
    %206 = vst.msk [vmem:[#allocation2 + $0x1] sm:$0xff] %vm205, %v158
    %207 = vst.msk [vmem:[#allocation2 + $0x9] sm:$0xff] %vm205, %v160
    %208 = vst.msk [vmem:[#allocation2 + $0x19] sm:$0xff] %vm205, %v162
    %209 = vst.msk [vmem:[#allocation2 + $0x21] sm:$0xff] %vm205, %v164
    %210 = vst.msk [vmem:[#allocation2 + $0x31] sm:$0xff] %vm205, %v166
    %211 = vst.msk [vmem:[#allocation2 + $0x39] sm:$0xff] %vm205, %v168
    %212 = vst.msk [vmem:[#allocation2 + $0x49] sm:$0xff] %vm205, %v170
    %213 = vst.msk [vmem:[#allocation2 + $0x51] sm:$0xff] %vm205, %v172
    %214 = vst.msk [vmem:[#allocation2 + $0x61] sm:$0xff] %vm205, %v174
    %215 = vst.msk [vmem:[#allocation2 + $0x69] sm:$0xff] %vm205, %v176
    %216 = vst.msk [vmem:[#allocation2 + $0x79] sm:$0xff] %vm205, %v178
    %217 = vst.msk [vmem:[#allocation2 + $0x81] sm:$0xff] %vm205, %v180
    %218 = vst.msk [vmem:[#allocation2 + $0x91] sm:$0xff] %vm205, %v182
    %219 = vst.msk [vmem:[#allocation2 + $0x99] sm:$0xff] %vm205, %v184
    %220 = vst.msk [vmem:[#allocation2 + $0xa9] sm:$0xff] %vm205, %v186
    %221 = vst.msk [vmem:[#allocation2 + $0xb1] sm:$0xff] %vm205, %v188
    %v222 = vld [vmem:[#allocation2] sm:$0xff]
    %v223 = vld [vmem:[#allocation2 + $0x8] sm:$0xff]
    %v224 = vld [vmem:[#allocation2 + $0x10] sm:$0x3]
    %v225 = vld [vmem:[#allocation2 + $0x60] sm:$0xff]
    %v226 = vld [vmem:[#allocation2 + $0x68] sm:$0xff]
    %v227 = vld [vmem:[#allocation2 + $0x70] sm:$0x3]
    %s228 = sld [smem:[#allocation7]]
    %v229 = vstv %s228
    %v230 = vmul.f32 %v222, %v229
    %v231 = vmul.f32 %v223, %v229
    %v232 = vmul.f32 %v225, %v229
    %v233 = vmul.f32 %v226, %v229
    %s234 = sld [smem:[#allocation7 + $0x1]]
    %v235 = vstv %s234
    %v236 = vmul.f32 %v222, %v235
    %v237 = vmul.f32 %v223, %v235
    %v238 = vmul.f32 %v225, %v235
    %v239 = vmul.f32 %v226, %v235
    %244 = vrot.lane.b32.xlu0 %v236, 127
    %v245 = vpop.permute.xlu0 %244
    %246 = vrot.lane.b32.xlu0 %v237, 127
    %v247 = vpop.permute.xlu0 %246
    %248 = vrot.lane.b32.xlu0 %v238, 127
    %v249 = vpop.permute.xlu0 %248
    %250 = vrot.lane.b32.xlu0 %v239, 127
    %v251 = vpop.permute.xlu0 %250
    %v256 = vadd.f32 %v230, %v245
    %v257 = vadd.f32 %v231, %v247
    %v258 = vadd.f32 %v232, %v249
    %v259 = vadd.f32 %v233, %v251
    %s260 = sld [smem:[#allocation7 + $0x2]]
    %v261 = vstv %s260
    %v262 = vmul.f32 %v222, %v261
    %v263 = vmul.f32 %v223, %v261
    %v264 = vmul.f32 %v225, %v261
    %v265 = vmul.f32 %v226, %v261
    %270 = vrot.lane.b32.xlu0 %v262, 126
    %v271 = vpop.permute.xlu0 %270
    %272 = vrot.lane.b32.xlu0 %v263, 126
    %v273 = vpop.permute.xlu0 %272
    %274 = vrot.lane.b32.xlu0 %v264, 126
    %v275 = vpop.permute.xlu0 %274
    %276 = vrot.lane.b32.xlu0 %v265, 126
    %v277 = vpop.permute.xlu0 %276
    %v282 = vadd.f32 %v256, %v271
    %v283 = vadd.f32 %v257, %v273
    %v284 = vadd.f32 %v258, %v275
    %v285 = vadd.f32 %v259, %v277
    %s286 = sld [smem:[#allocation7 + $0x3]]
    %v287 = vstv %s286
    %v288 = vmul.f32 %v222, %v287
    %v289 = vmul.f32 %v223, %v287
    %v290 = vmul.f32 %v224, %v287
    %v291 = vmul.f32 %v225, %v287
    %v292 = vmul.f32 %v226, %v287
    %v293 = vmul.f32 %v227, %v287
    %vm300 = vcmask 1046528
    %v301 = vrot.slane %v288, 1
    %v302 = vrot.slane %v289, 1
    %v303 = vsel %vm300, %v301, %v302
    %v304 = vrot.slane %v290, 1
    %v305 = vsel %vm300, %v302, %v304
    %v306 = vrot.slane %v291, 1
    %v307 = vrot.slane %v292, 1
    %v308 = vsel %vm300, %v306, %v307
    %v309 = vrot.slane %v293, 1
    %v310 = vsel %vm300, %v307, %v309
    %v315 = vadd.f32 %v282, %v303
    %v316 = vadd.f32 %v283, %v305
    %v317 = vadd.f32 %v284, %v308
    %v318 = vadd.f32 %v285, %v310
    %s319 = sld [smem:[#allocation7 + $0x4]]
    %v320 = vstv %s319
    %v321 = vmul.f32 %v222, %v320
    %v322 = vmul.f32 %v223, %v320
    %v323 = vmul.f32 %v224, %v320
    %v324 = vmul.f32 %v225, %v320
    %v325 = vmul.f32 %v226, %v320
    %v326 = vmul.f32 %v227, %v320
    %v333 = vrot.slane %v321, 1
    %v334 = vrot.slane %v322, 1
    %v335 = vsel %vm300, %v333, %v334
    %v336 = vrot.slane %v323, 1
    %v337 = vsel %vm300, %v334, %v336
    %v338 = vrot.slane %v324, 1
    %v339 = vrot.slane %v325, 1
    %v340 = vsel %vm300, %v338, %v339
    %v341 = vrot.slane %v326, 1
    %v342 = vsel %vm300, %v339, %v341
    %343 = vrot.lane.b32.xlu0 %v335, 127
    %v344 = vpop.permute.xlu0 %343
    %345 = vrot.lane.b32.xlu0 %v337, 127
    %v346 = vpop.permute.xlu0 %345
    %347 = vrot.lane.b32.xlu0 %v340, 127
    %v348 = vpop.permute.xlu0 %347
    %349 = vrot.lane.b32.xlu0 %v342, 127
    %v350 = vpop.permute.xlu0 %349
    %v355 = vadd.f32 %v315, %v344
    %v356 = vadd.f32 %v316, %v346
    %v357 = vadd.f32 %v317, %v348
    %v358 = vadd.f32 %v318, %v350
    %s359 = sld [smem:[#allocation7 + $0x5]]
    %v360 = vstv %s359
    %v361 = vmul.f32 %v222, %v360
    %v362 = vmul.f32 %v223, %v360
    %v363 = vmul.f32 %v224, %v360
    %v364 = vmul.f32 %v225, %v360
    %v365 = vmul.f32 %v226, %v360
    %v366 = vmul.f32 %v227, %v360
    %v373 = vrot.slane %v361, 1
    %v374 = vrot.slane %v362, 1
    %v375 = vsel %vm300, %v373, %v374
    %v376 = vrot.slane %v363, 1
    %v377 = vsel %vm300, %v374, %v376
    %v378 = vrot.slane %v364, 1
    %v379 = vrot.slane %v365, 1
    %v380 = vsel %vm300, %v378, %v379
    %v381 = vrot.slane %v366, 1
    %v382 = vsel %vm300, %v379, %v381
    %383 = vrot.lane.b32.xlu0 %v375, 126
    %v384 = vpop.permute.xlu0 %383
    %385 = vrot.lane.b32.xlu0 %v377, 126
    %v386 = vpop.permute.xlu0 %385
    %387 = vrot.lane.b32.xlu0 %v380, 126
    %v388 = vpop.permute.xlu0 %387
    %389 = vrot.lane.b32.xlu0 %v382, 126
    %v390 = vpop.permute.xlu0 %389
    %v395 = vadd.f32 %v355, %v384
    %v396 = vadd.f32 %v356, %v386
    %v397 = vadd.f32 %v357, %v388
    %v398 = vadd.f32 %v358, %v390
    %s399 = sld [smem:[#allocation7 + $0x6]]
    %v400 = vstv %s399
    %v401 = vmul.f32 %v222, %v400
    %v402 = vmul.f32 %v223, %v400
    %v403 = vmul.f32 %v224, %v400
    %v404 = vmul.f32 %v225, %v400
    %v405 = vmul.f32 %v226, %v400
    %v406 = vmul.f32 %v227, %v400
    %vm413 = vcmask 1045504
    %v414 = vrot.slane %v401, 2
    %v415 = vrot.slane %v402, 2
    %v416 = vsel %vm413, %v414, %v415
    %v417 = vrot.slane %v403, 2
    %v418 = vsel %vm413, %v415, %v417
    %v419 = vrot.slane %v404, 2
    %v420 = vrot.slane %v405, 2
    %v421 = vsel %vm413, %v419, %v420
    %v422 = vrot.slane %v406, 2
    %v423 = vsel %vm413, %v420, %v422
    %v428 = vadd.f32 %v395, %v416
    %v429 = vadd.f32 %v396, %v418
    %v430 = vadd.f32 %v397, %v421
    %v431 = vadd.f32 %v398, %v423
    %s432 = sld [smem:[#allocation7 + $0x7]]
    %v433 = vstv %s432
    %v434 = vmul.f32 %v222, %v433
    %v435 = vmul.f32 %v223, %v433
    %v436 = vmul.f32 %v224, %v433
    %v437 = vmul.f32 %v225, %v433
    %v438 = vmul.f32 %v226, %v433
    %v439 = vmul.f32 %v227, %v433
    %v446 = vrot.slane %v434, 2
    %v447 = vrot.slane %v435, 2
    %v448 = vsel %vm413, %v446, %v447
    %v449 = vrot.slane %v436, 2
    %v450 = vsel %vm413, %v447, %v449
    %v451 = vrot.slane %v437, 2
    %v452 = vrot.slane %v438, 2
    %v453 = vsel %vm413, %v451, %v452
    %v454 = vrot.slane %v439, 2
    %v455 = vsel %vm413, %v452, %v454
    %456 = vrot.lane.b32.xlu0 %v448, 127
    %v457 = vpop.permute.xlu0 %456
    %458 = vrot.lane.b32.xlu0 %v450, 127
    %v459 = vpop.permute.xlu0 %458
    %460 = vrot.lane.b32.xlu0 %v453, 127
    %v461 = vpop.permute.xlu0 %460
    %462 = vrot.lane.b32.xlu0 %v455, 127
    %v463 = vpop.permute.xlu0 %462
    %v468 = vadd.f32 %v428, %v457
    %v469 = vadd.f32 %v429, %v459
    %v470 = vadd.f32 %v430, %v461
    %v471 = vadd.f32 %v431, %v463
    %s472 = sld [smem:[#allocation7 + $0x8]]
    %v473 = vstv %s472
    %v474 = vmul.f32 %v222, %v473
    %v475 = vmul.f32 %v223, %v473
    %v476 = vmul.f32 %v224, %v473
    %v477 = vmul.f32 %v225, %v473
    %v478 = vmul.f32 %v226, %v473
    %v479 = vmul.f32 %v227, %v473
    %v486 = vrot.slane %v474, 2
    %v487 = vrot.slane %v475, 2
    %v488 = vsel %vm413, %v486, %v487
    %v489 = vrot.slane %v476, 2
    %v490 = vsel %vm413, %v487, %v489
    %v491 = vrot.slane %v477, 2
    %v492 = vrot.slane %v478, 2
    %v493 = vsel %vm413, %v491, %v492
    %v494 = vrot.slane %v479, 2
    %v495 = vsel %vm413, %v492, %v494
    %496 = vrot.lane.b32.xlu0 %v488, 126
    %v497 = vpop.permute.xlu0 %496
    %498 = vrot.lane.b32.xlu0 %v490, 126
    %v499 = vpop.permute.xlu0 %498
    %500 = vrot.lane.b32.xlu0 %v493, 126
    %v501 = vpop.permute.xlu0 %500
    %502 = vrot.lane.b32.xlu0 %v495, 126
    %v503 = vpop.permute.xlu0 %502
    %v508 = vadd.f32 %v468, %v497
    %v509 = vadd.f32 %v469, %v499
    %v510 = vadd.f32 %v470, %v501
    %v511 = vadd.f32 %v471, %v503
    %s512 = scalar_lea.vmem [#allocation2], 24
    %v513 = vld [vmem:[%s512] sm:$0xff]
    %v514 = vld [vmem:[%s512 + $0x8] sm:$0xff]
    %v515 = vld [vmem:[%s512 + $0x10] sm:$0x3]
    %v516 = vld [vmem:[%s512 + $0x60] sm:$0xff]
    %v517 = vld [vmem:[%s512 + $0x68] sm:$0xff]
    %v518 = vld [vmem:[%s512 + $0x70] sm:$0x3]
    %s519 = sld [smem:[#allocation7 + $0x80]]
    %v520 = vstv %s519
    %v521 = vmul.f32 %v513, %v520
    %v522 = vmul.f32 %v514, %v520
    %v523 = vmul.f32 %v516, %v520
    %v524 = vmul.f32 %v517, %v520
    %s525 = sld [smem:[#allocation7 + $0x81]]
    %v526 = vstv %s525
    %v527 = vmul.f32 %v513, %v526
    %v528 = vmul.f32 %v514, %v526
    %v529 = vmul.f32 %v516, %v526
    %v530 = vmul.f32 %v517, %v526
    %535 = vrot.lane.b32.xlu0 %v527, 127
    %v536 = vpop.permute.xlu0 %535
    %537 = vrot.lane.b32.xlu0 %v528, 127
    %v538 = vpop.permute.xlu0 %537
    %539 = vrot.lane.b32.xlu0 %v529, 127
    %v540 = vpop.permute.xlu0 %539
    %541 = vrot.lane.b32.xlu0 %v530, 127
    %v542 = vpop.permute.xlu0 %541
    %v547 = vadd.f32 %v521, %v536
    %v548 = vadd.f32 %v522, %v538
    %v549 = vadd.f32 %v523, %v540
    %v550 = vadd.f32 %v524, %v542
    %s551 = sld [smem:[#allocation7 + $0x82]]
    %v552 = vstv %s551
    %v553 = vmul.f32 %v513, %v552
    %v554 = vmul.f32 %v514, %v552
    %v555 = vmul.f32 %v516, %v552
    %v556 = vmul.f32 %v517, %v552
    %561 = vrot.lane.b32.xlu0 %v553, 126
    %v562 = vpop.permute.xlu0 %561
    %563 = vrot.lane.b32.xlu0 %v554, 126
    %v564 = vpop.permute.xlu0 %563
    %565 = vrot.lane.b32.xlu0 %v555, 126
    %v566 = vpop.permute.xlu0 %565
    %567 = vrot.lane.b32.xlu0 %v556, 126
    %v568 = vpop.permute.xlu0 %567
    %v573 = vadd.f32 %v547, %v562
    %v574 = vadd.f32 %v548, %v564
    %v575 = vadd.f32 %v549, %v566
    %v576 = vadd.f32 %v550, %v568
    %s577 = sld [smem:[#allocation7 + $0x83]]
    %v578 = vstv %s577
    %v579 = vmul.f32 %v513, %v578
    %v580 = vmul.f32 %v514, %v578
    %v581 = vmul.f32 %v515, %v578
    %v582 = vmul.f32 %v516, %v578
    %v583 = vmul.f32 %v517, %v578
    %v584 = vmul.f32 %v518, %v578
    %v591 = vrot.slane %v579, 1
    %v592 = vrot.slane %v580, 1
    %v593 = vsel %vm300, %v591, %v592
    %v594 = vrot.slane %v581, 1
    %v595 = vsel %vm300, %v592, %v594
    %v596 = vrot.slane %v582, 1
    %v597 = vrot.slane %v583, 1
    %v598 = vsel %vm300, %v596, %v597
    %v599 = vrot.slane %v584, 1
    %v600 = vsel %vm300, %v597, %v599
    %v605 = vadd.f32 %v573, %v593
    %v606 = vadd.f32 %v574, %v595
    %v607 = vadd.f32 %v575, %v598
    %v608 = vadd.f32 %v576, %v600
    %s609 = sld [smem:[#allocation7 + $0x84]]
    %v610 = vstv %s609
    %v611 = vmul.f32 %v513, %v610
    %v612 = vmul.f32 %v514, %v610
    %v613 = vmul.f32 %v515, %v610
    %v614 = vmul.f32 %v516, %v610
    %v615 = vmul.f32 %v517, %v610
    %v616 = vmul.f32 %v518, %v610
    %v623 = vrot.slane %v611, 1
    %v624 = vrot.slane %v612, 1
    %v625 = vsel %vm300, %v623, %v624
    %v626 = vrot.slane %v613, 1
    %v627 = vsel %vm300, %v624, %v626
    %v628 = vrot.slane %v614, 1
    %v629 = vrot.slane %v615, 1
    %v630 = vsel %vm300, %v628, %v629
    %v631 = vrot.slane %v616, 1
    %v632 = vsel %vm300, %v629, %v631
    %633 = vrot.lane.b32.xlu0 %v625, 127
    %v634 = vpop.permute.xlu0 %633
    %635 = vrot.lane.b32.xlu0 %v627, 127
    %v636 = vpop.permute.xlu0 %635
    %637 = vrot.lane.b32.xlu0 %v630, 127
    %v638 = vpop.permute.xlu0 %637
    %639 = vrot.lane.b32.xlu0 %v632, 127
    %v640 = vpop.permute.xlu0 %639
    %v645 = vadd.f32 %v605, %v634
    %v646 = vadd.f32 %v606, %v636
    %v647 = vadd.f32 %v607, %v638
    %v648 = vadd.f32 %v608, %v640
    %s649 = sld [smem:[#allocation7 + $0x85]]
    %v650 = vstv %s649
    %v651 = vmul.f32 %v513, %v650
    %v652 = vmul.f32 %v514, %v650
    %v653 = vmul.f32 %v515, %v650
    %v654 = vmul.f32 %v516, %v650
    %v655 = vmul.f32 %v517, %v650
    %v656 = vmul.f32 %v518, %v650
    %v663 = vrot.slane %v651, 1
    %v664 = vrot.slane %v652, 1
    %v665 = vsel %vm300, %v663, %v664
    %v666 = vrot.slane %v653, 1
    %v667 = vsel %vm300, %v664, %v666
    %v668 = vrot.slane %v654, 1
    %v669 = vrot.slane %v655, 1
    %v670 = vsel %vm300, %v668, %v669
    %v671 = vrot.slane %v656, 1
    %v672 = vsel %vm300, %v669, %v671
    %673 = vrot.lane.b32.xlu0 %v665, 126
    %v674 = vpop.permute.xlu0 %673
    %675 = vrot.lane.b32.xlu0 %v667, 126
    %v676 = vpop.permute.xlu0 %675
    %677 = vrot.lane.b32.xlu0 %v670, 126
    %v678 = vpop.permute.xlu0 %677
    %679 = vrot.lane.b32.xlu0 %v672, 126
    %v680 = vpop.permute.xlu0 %679
    %v685 = vadd.f32 %v645, %v674
    %v686 = vadd.f32 %v646, %v676
    %v687 = vadd.f32 %v647, %v678
    %v688 = vadd.f32 %v648, %v680
    %s689 = sld [smem:[#allocation7 + $0x86]]
    %v690 = vstv %s689
    %v691 = vmul.f32 %v513, %v690
    %v692 = vmul.f32 %v514, %v690
    %v693 = vmul.f32 %v515, %v690
    %v694 = vmul.f32 %v516, %v690
    %v695 = vmul.f32 %v517, %v690
    %v696 = vmul.f32 %v518, %v690
    %v703 = vrot.slane %v691, 2
    %v704 = vrot.slane %v692, 2
    %v705 = vsel %vm413, %v703, %v704
    %v706 = vrot.slane %v693, 2
    %v707 = vsel %vm413, %v704, %v706
    %v708 = vrot.slane %v694, 2
    %v709 = vrot.slane %v695, 2
    %v710 = vsel %vm413, %v708, %v709
    %v711 = vrot.slane %v696, 2
    %v712 = vsel %vm413, %v709, %v711
    %v717 = vadd.f32 %v685, %v705
    %v718 = vadd.f32 %v686, %v707
    %v719 = vadd.f32 %v687, %v710
    %v720 = vadd.f32 %v688, %v712
    %s721 = sld [smem:[#allocation7 + $0x87]]
    %v722 = vstv %s721
    %v723 = vmul.f32 %v513, %v722
    %v724 = vmul.f32 %v514, %v722
    %v725 = vmul.f32 %v515, %v722
    %v726 = vmul.f32 %v516, %v722
    %v727 = vmul.f32 %v517, %v722
    %v728 = vmul.f32 %v518, %v722
    %v735 = vrot.slane %v723, 2
    %v736 = vrot.slane %v724, 2
    %v737 = vsel %vm413, %v735, %v736
    %v738 = vrot.slane %v725, 2
    %v739 = vsel %vm413, %v736, %v738
    %v740 = vrot.slane %v726, 2
    %v741 = vrot.slane %v727, 2
    %v742 = vsel %vm413, %v740, %v741
    %v743 = vrot.slane %v728, 2
    %v744 = vsel %vm413, %v741, %v743
    %745 = vrot.lane.b32.xlu0 %v737, 127
    %v746 = vpop.permute.xlu0 %745
    %747 = vrot.lane.b32.xlu0 %v739, 127
    %v748 = vpop.permute.xlu0 %747
    %749 = vrot.lane.b32.xlu0 %v742, 127
    %v750 = vpop.permute.xlu0 %749
    %751 = vrot.lane.b32.xlu0 %v744, 127
    %v752 = vpop.permute.xlu0 %751
    %v757 = vadd.f32 %v717, %v746
    %v758 = vadd.f32 %v718, %v748
    %v759 = vadd.f32 %v719, %v750
    %v760 = vadd.f32 %v720, %v752
    %s761 = sld [smem:[#allocation7 + $0x88]]
    %v762 = vstv %s761
    %v763 = vmul.f32 %v513, %v762
    %v764 = vmul.f32 %v514, %v762
    %v765 = vmul.f32 %v515, %v762
    %v766 = vmul.f32 %v516, %v762
    %v767 = vmul.f32 %v517, %v762
    %v768 = vmul.f32 %v518, %v762
    %v775 = vrot.slane %v763, 2
    %v776 = vrot.slane %v764, 2
    %v777 = vsel %vm413, %v775, %v776
    %v778 = vrot.slane %v765, 2
    %v779 = vsel %vm413, %v776, %v778
    %v780 = vrot.slane %v766, 2
    %v781 = vrot.slane %v767, 2
    %v782 = vsel %vm413, %v780, %v781
    %v783 = vrot.slane %v768, 2
    %v784 = vsel %vm413, %v781, %v783
    %785 = vrot.lane.b32.xlu0 %v777, 126
    %v786 = vpop.permute.xlu0 %785
    %787 = vrot.lane.b32.xlu0 %v779, 126
    %v788 = vpop.permute.xlu0 %787
    %789 = vrot.lane.b32.xlu0 %v782, 126
    %v790 = vpop.permute.xlu0 %789
    %791 = vrot.lane.b32.xlu0 %v784, 126
    %v792 = vpop.permute.xlu0 %791
    %v797 = vadd.f32 %v757, %v786
    %v798 = vadd.f32 %v758, %v788
    %v799 = vadd.f32 %v759, %v790
    %v800 = vadd.f32 %v760, %v792
    %s801 = scalar_lea.vmem [#allocation2], 48
    %v802 = vld [vmem:[%s801] sm:$0xff]
    %v803 = vld [vmem:[%s801 + $0x8] sm:$0xff]
    %v804 = vld [vmem:[%s801 + $0x10] sm:$0x3]
    %v805 = vld [vmem:[%s801 + $0x60] sm:$0xff]
    %v806 = vld [vmem:[%s801 + $0x68] sm:$0xff]
    %v807 = vld [vmem:[%s801 + $0x70] sm:$0x3]
    %s808 = sld [smem:[#allocation7 + $0x100]]
    %v809 = vstv %s808
    %v810 = vmul.f32 %v802, %v809
    %v811 = vmul.f32 %v803, %v809
    %v812 = vmul.f32 %v805, %v809
    %v813 = vmul.f32 %v806, %v809
    %s814 = sld [smem:[#allocation7 + $0x101]]
    %v815 = vstv %s814
    %v816 = vmul.f32 %v802, %v815
    %v817 = vmul.f32 %v803, %v815
    %v818 = vmul.f32 %v805, %v815
    %v819 = vmul.f32 %v806, %v815
    %824 = vrot.lane.b32.xlu0 %v816, 127
    %v825 = vpop.permute.xlu0 %824
    %826 = vrot.lane.b32.xlu0 %v817, 127
    %v827 = vpop.permute.xlu0 %826
    %828 = vrot.lane.b32.xlu0 %v818, 127
    %v829 = vpop.permute.xlu0 %828
    %830 = vrot.lane.b32.xlu0 %v819, 127
    %v831 = vpop.permute.xlu0 %830
    %v836 = vadd.f32 %v810, %v825
    %v837 = vadd.f32 %v811, %v827
    %v838 = vadd.f32 %v812, %v829
    %v839 = vadd.f32 %v813, %v831
    %s840 = sld [smem:[#allocation7 + $0x102]]
    %v841 = vstv %s840
    %v842 = vmul.f32 %v802, %v841
    %v843 = vmul.f32 %v803, %v841
    %v844 = vmul.f32 %v805, %v841
    %v845 = vmul.f32 %v806, %v841
    %850 = vrot.lane.b32.xlu0 %v842, 126
    %v851 = vpop.permute.xlu0 %850
    %852 = vrot.lane.b32.xlu0 %v843, 126
    %v853 = vpop.permute.xlu0 %852
    %854 = vrot.lane.b32.xlu0 %v844, 126
    %v855 = vpop.permute.xlu0 %854
    %856 = vrot.lane.b32.xlu0 %v845, 126
    %v857 = vpop.permute.xlu0 %856
    %v862 = vadd.f32 %v836, %v851
    %v863 = vadd.f32 %v837, %v853
    %v864 = vadd.f32 %v838, %v855
    %v865 = vadd.f32 %v839, %v857
    %s866 = sld [smem:[#allocation7 + $0x103]]
    %v867 = vstv %s866
    %v868 = vmul.f32 %v802, %v867
    %v869 = vmul.f32 %v803, %v867
    %v870 = vmul.f32 %v804, %v867
    %v871 = vmul.f32 %v805, %v867
    %v872 = vmul.f32 %v806, %v867
    %v873 = vmul.f32 %v807, %v867
    %v880 = vrot.slane %v868, 1
    %v881 = vrot.slane %v869, 1
    %v882 = vsel %vm300, %v880, %v881
    %v883 = vrot.slane %v870, 1
    %v884 = vsel %vm300, %v881, %v883
    %v885 = vrot.slane %v871, 1
    %v886 = vrot.slane %v872, 1
    %v887 = vsel %vm300, %v885, %v886
    %v888 = vrot.slane %v873, 1
    %v889 = vsel %vm300, %v886, %v888
    %v894 = vadd.f32 %v862, %v882
    %v895 = vadd.f32 %v863, %v884
    %v896 = vadd.f32 %v864, %v887
    %v897 = vadd.f32 %v865, %v889
    %s898 = sld [smem:[#allocation7 + $0x104]]
    %v899 = vstv %s898
    %v900 = vmul.f32 %v802, %v899
    %v901 = vmul.f32 %v803, %v899
    %v902 = vmul.f32 %v804, %v899
    %v903 = vmul.f32 %v805, %v899
    %v904 = vmul.f32 %v806, %v899
    %v905 = vmul.f32 %v807, %v899
    %v912 = vrot.slane %v900, 1
    %v913 = vrot.slane %v901, 1
    %v914 = vsel %vm300, %v912, %v913
    %v915 = vrot.slane %v902, 1
    %v916 = vsel %vm300, %v913, %v915
    %v917 = vrot.slane %v903, 1
    %v918 = vrot.slane %v904, 1
    %v919 = vsel %vm300, %v917, %v918
    %v920 = vrot.slane %v905, 1
    %v921 = vsel %vm300, %v918, %v920
    %922 = vrot.lane.b32.xlu0 %v914, 127
    %v923 = vpop.permute.xlu0 %922
    %924 = vrot.lane.b32.xlu0 %v916, 127
    %v925 = vpop.permute.xlu0 %924
    %926 = vrot.lane.b32.xlu0 %v919, 127
    %v927 = vpop.permute.xlu0 %926
    %928 = vrot.lane.b32.xlu0 %v921, 127
    %v929 = vpop.permute.xlu0 %928
    %v934 = vadd.f32 %v894, %v923
    %v935 = vadd.f32 %v895, %v925
    %v936 = vadd.f32 %v896, %v927
    %v937 = vadd.f32 %v897, %v929
    %s938 = sld [smem:[#allocation7 + $0x105]]
    %v939 = vstv %s938
    %v940 = vmul.f32 %v802, %v939
    %v941 = vmul.f32 %v803, %v939
    %v942 = vmul.f32 %v804, %v939
    %v943 = vmul.f32 %v805, %v939
    %v944 = vmul.f32 %v806, %v939
    %v945 = vmul.f32 %v807, %v939
    %v952 = vrot.slane %v940, 1
    %v953 = vrot.slane %v941, 1
    %v954 = vsel %vm300, %v952, %v953
    %v955 = vrot.slane %v942, 1
    %v956 = vsel %vm300, %v953, %v955
    %v957 = vrot.slane %v943, 1
    %v958 = vrot.slane %v944, 1
    %v959 = vsel %vm300, %v957, %v958
    %v960 = vrot.slane %v945, 1
    %v961 = vsel %vm300, %v958, %v960
    %962 = vrot.lane.b32.xlu0 %v954, 126
    %v963 = vpop.permute.xlu0 %962
    %964 = vrot.lane.b32.xlu0 %v956, 126
    %v965 = vpop.permute.xlu0 %964
    %966 = vrot.lane.b32.xlu0 %v959, 126
    %v967 = vpop.permute.xlu0 %966
    %968 = vrot.lane.b32.xlu0 %v961, 126
    %v969 = vpop.permute.xlu0 %968
    %v974 = vadd.f32 %v934, %v963
    %v975 = vadd.f32 %v935, %v965
    %v976 = vadd.f32 %v936, %v967
    %v977 = vadd.f32 %v937, %v969
    %s978 = sld [smem:[#allocation7 + $0x106]]
    %v979 = vstv %s978
    %v980 = vmul.f32 %v802, %v979
    %v981 = vmul.f32 %v803, %v979
    %v982 = vmul.f32 %v804, %v979
    %v983 = vmul.f32 %v805, %v979
    %v984 = vmul.f32 %v806, %v979
    %v985 = vmul.f32 %v807, %v979
    %v992 = vrot.slane %v980, 2
    %v993 = vrot.slane %v981, 2
    %v994 = vsel %vm413, %v992, %v993
    %v995 = vrot.slane %v982, 2
    %v996 = vsel %vm413, %v993, %v995
    %v997 = vrot.slane %v983, 2
    %v998 = vrot.slane %v984, 2
    %v999 = vsel %vm413, %v997, %v998
    %v1000 = vrot.slane %v985, 2
    %v1001 = vsel %vm413, %v998, %v1000
    %v1006 = vadd.f32 %v974, %v994
    %v1007 = vadd.f32 %v975, %v996
    %v1008 = vadd.f32 %v976, %v999
    %v1009 = vadd.f32 %v977, %v1001
    %s1010 = sld [smem:[#allocation7 + $0x107]]
    %v1011 = vstv %s1010
    %v1012 = vmul.f32 %v802, %v1011
    %v1013 = vmul.f32 %v803, %v1011
    %v1014 = vmul.f32 %v804, %v1011
    %v1015 = vmul.f32 %v805, %v1011
    %v1016 = vmul.f32 %v806, %v1011
    %v1017 = vmul.f32 %v807, %v1011
    %v1024 = vrot.slane %v1012, 2
    %v1025 = vrot.slane %v1013, 2
    %v1026 = vsel %vm413, %v1024, %v1025
    %v1027 = vrot.slane %v1014, 2
    %v1028 = vsel %vm413, %v1025, %v1027
    %v1029 = vrot.slane %v1015, 2
    %v1030 = vrot.slane %v1016, 2
    %v1031 = vsel %vm413, %v1029, %v1030
    %v1032 = vrot.slane %v1017, 2
    %v1033 = vsel %vm413, %v1030, %v1032
    %1034 = vrot.lane.b32.xlu0 %v1026, 127
    %v1035 = vpop.permute.xlu0 %1034
    %1036 = vrot.lane.b32.xlu0 %v1028, 127
    %v1037 = vpop.permute.xlu0 %1036
    %1038 = vrot.lane.b32.xlu0 %v1031, 127
    %v1039 = vpop.permute.xlu0 %1038
    %1040 = vrot.lane.b32.xlu0 %v1033, 127
    %v1041 = vpop.permute.xlu0 %1040
    %v1046 = vadd.f32 %v1006, %v1035
    %v1047 = vadd.f32 %v1007, %v1037
    %v1048 = vadd.f32 %v1008, %v1039
    %v1049 = vadd.f32 %v1009, %v1041
    %s1050 = sld [smem:[#allocation7 + $0x108]]
    %v1051 = vstv %s1050
    %v1052 = vmul.f32 %v802, %v1051
    %v1053 = vmul.f32 %v803, %v1051
    %v1054 = vmul.f32 %v804, %v1051
    %v1055 = vmul.f32 %v805, %v1051
    %v1056 = vmul.f32 %v806, %v1051
    %v1057 = vmul.f32 %v807, %v1051
    %v1064 = vrot.slane %v1052, 2
    %v1065 = vrot.slane %v1053, 2
    %v1066 = vsel %vm413, %v1064, %v1065
    %v1067 = vrot.slane %v1054, 2
    %v1068 = vsel %vm413, %v1065, %v1067
    %v1069 = vrot.slane %v1055, 2
    %v1070 = vrot.slane %v1056, 2
    %v1071 = vsel %vm413, %v1069, %v1070
    %v1072 = vrot.slane %v1057, 2
    %v1073 = vsel %vm413, %v1070, %v1072
    %1074 = vrot.lane.b32.xlu0 %v1066, 126
    %v1075 = vpop.permute.xlu0 %1074
    %1076 = vrot.lane.b32.xlu0 %v1068, 126
    %v1077 = vpop.permute.xlu0 %1076
    %1078 = vrot.lane.b32.xlu0 %v1071, 126
    %v1079 = vpop.permute.xlu0 %1078
    %1080 = vrot.lane.b32.xlu0 %v1073, 126
    %v1081 = vpop.permute.xlu0 %1080
    %v1086 = vadd.f32 %v1046, %v1075
    %v1087 = vadd.f32 %v1047, %v1077
    %v1088 = vadd.f32 %v1048, %v1079
    %v1089 = vadd.f32 %v1049, %v1081
    %s1090 = scalar_lea.vmem [#allocation2], 72
    %v1091 = vld [vmem:[%s1090] sm:$0xff]
    %v1092 = vld [vmem:[%s1090 + $0x8] sm:$0xff]
    %v1093 = vld [vmem:[%s1090 + $0x10] sm:$0x3]
    %v1094 = vld [vmem:[%s1090 + $0x60] sm:$0xff]
    %v1095 = vld [vmem:[%s1090 + $0x68] sm:$0xff]
    %v1096 = vld [vmem:[%s1090 + $0x70] sm:$0x3]
    %s1097 = sld [smem:[#allocation7 + $0x180]]
    %v1098 = vstv %s1097
    %v1099 = vmul.f32 %v1091, %v1098
    %v1100 = vmul.f32 %v1092, %v1098
    %v1101 = vmul.f32 %v1094, %v1098
    %v1102 = vmul.f32 %v1095, %v1098
    %s1103 = sld [smem:[#allocation7 + $0x181]]
    %v1104 = vstv %s1103
    %v1105 = vmul.f32 %v1091, %v1104
    %v1106 = vmul.f32 %v1092, %v1104
    %v1107 = vmul.f32 %v1094, %v1104
    %v1108 = vmul.f32 %v1095, %v1104
    %1113 = vrot.lane.b32.xlu0 %v1105, 127
    %v1114 = vpop.permute.xlu0 %1113
    %1115 = vrot.lane.b32.xlu0 %v1106, 127
    %v1116 = vpop.permute.xlu0 %1115
    %1117 = vrot.lane.b32.xlu0 %v1107, 127
    %v1118 = vpop.permute.xlu0 %1117
    %1119 = vrot.lane.b32.xlu0 %v1108, 127
    %v1120 = vpop.permute.xlu0 %1119
    %v1125 = vadd.f32 %v1099, %v1114
    %v1126 = vadd.f32 %v1100, %v1116
    %v1127 = vadd.f32 %v1101, %v1118
    %v1128 = vadd.f32 %v1102, %v1120
    %s1129 = sld [smem:[#allocation7 + $0x182]]
    %v1130 = vstv %s1129
    %v1131 = vmul.f32 %v1091, %v1130
    %v1132 = vmul.f32 %v1092, %v1130
    %v1133 = vmul.f32 %v1094, %v1130
    %v1134 = vmul.f32 %v1095, %v1130
    %1139 = vrot.lane.b32.xlu0 %v1131, 126
    %v1140 = vpop.permute.xlu0 %1139
    %1141 = vrot.lane.b32.xlu0 %v1132, 126
    %v1142 = vpop.permute.xlu0 %1141
    %1143 = vrot.lane.b32.xlu0 %v1133, 126
    %v1144 = vpop.permute.xlu0 %1143
    %1145 = vrot.lane.b32.xlu0 %v1134, 126
    %v1146 = vpop.permute.xlu0 %1145
    %v1151 = vadd.f32 %v1125, %v1140
    %v1152 = vadd.f32 %v1126, %v1142
    %v1153 = vadd.f32 %v1127, %v1144
    %v1154 = vadd.f32 %v1128, %v1146
    %s1155 = sld [smem:[#allocation7 + $0x183]]
    %v1156 = vstv %s1155
    %v1157 = vmul.f32 %v1091, %v1156
    %v1158 = vmul.f32 %v1092, %v1156
    %v1159 = vmul.f32 %v1093, %v1156
    %v1160 = vmul.f32 %v1094, %v1156
    %v1161 = vmul.f32 %v1095, %v1156
    %v1162 = vmul.f32 %v1096, %v1156
    %v1169 = vrot.slane %v1157, 1
    %v1170 = vrot.slane %v1158, 1
    %v1171 = vsel %vm300, %v1169, %v1170
    %v1172 = vrot.slane %v1159, 1
    %v1173 = vsel %vm300, %v1170, %v1172
    %v1174 = vrot.slane %v1160, 1
    %v1175 = vrot.slane %v1161, 1
    %v1176 = vsel %vm300, %v1174, %v1175
    %v1177 = vrot.slane %v1162, 1
    %v1178 = vsel %vm300, %v1175, %v1177
    %v1183 = vadd.f32 %v1151, %v1171
    %v1184 = vadd.f32 %v1152, %v1173
    %v1185 = vadd.f32 %v1153, %v1176
    %v1186 = vadd.f32 %v1154, %v1178
    %s1187 = sld [smem:[#allocation7 + $0x184]]
    %v1188 = vstv %s1187
    %v1189 = vmul.f32 %v1091, %v1188
    %v1190 = vmul.f32 %v1092, %v1188
    %v1191 = vmul.f32 %v1093, %v1188
    %v1192 = vmul.f32 %v1094, %v1188
    %v1193 = vmul.f32 %v1095, %v1188
    %v1194 = vmul.f32 %v1096, %v1188
    %v1201 = vrot.slane %v1189, 1
    %v1202 = vrot.slane %v1190, 1
    %v1203 = vsel %vm300, %v1201, %v1202
    %v1204 = vrot.slane %v1191, 1
    %v1205 = vsel %vm300, %v1202, %v1204
    %v1206 = vrot.slane %v1192, 1
    %v1207 = vrot.slane %v1193, 1
    %v1208 = vsel %vm300, %v1206, %v1207
    %v1209 = vrot.slane %v1194, 1
    %v1210 = vsel %vm300, %v1207, %v1209
    %1211 = vrot.lane.b32.xlu0 %v1203, 127
    %v1212 = vpop.permute.xlu0 %1211
    %1213 = vrot.lane.b32.xlu0 %v1205, 127
    %v1214 = vpop.permute.xlu0 %1213
    %1215 = vrot.lane.b32.xlu0 %v1208, 127
    %v1216 = vpop.permute.xlu0 %1215
    %1217 = vrot.lane.b32.xlu0 %v1210, 127
    %v1218 = vpop.permute.xlu0 %1217
    %v1223 = vadd.f32 %v1183, %v1212
    %v1224 = vadd.f32 %v1184, %v1214
    %v1225 = vadd.f32 %v1185, %v1216
    %v1226 = vadd.f32 %v1186, %v1218
    %s1227 = sld [smem:[#allocation7 + $0x185]]
    %v1228 = vstv %s1227
    %v1229 = vmul.f32 %v1091, %v1228
    %v1230 = vmul.f32 %v1092, %v1228
    %v1231 = vmul.f32 %v1093, %v1228
    %v1232 = vmul.f32 %v1094, %v1228
    %v1233 = vmul.f32 %v1095, %v1228
    %v1234 = vmul.f32 %v1096, %v1228
    %v1241 = vrot.slane %v1229, 1
    %v1242 = vrot.slane %v1230, 1
    %v1243 = vsel %vm300, %v1241, %v1242
    %v1244 = vrot.slane %v1231, 1
    %v1245 = vsel %vm300, %v1242, %v1244
    %v1246 = vrot.slane %v1232, 1
    %v1247 = vrot.slane %v1233, 1
    %v1248 = vsel %vm300, %v1246, %v1247
    %v1249 = vrot.slane %v1234, 1
    %v1250 = vsel %vm300, %v1247, %v1249
    %1251 = vrot.lane.b32.xlu0 %v1243, 126
    %v1252 = vpop.permute.xlu0 %1251
    %1253 = vrot.lane.b32.xlu0 %v1245, 126
    %v1254 = vpop.permute.xlu0 %1253
    %1255 = vrot.lane.b32.xlu0 %v1248, 126
    %v1256 = vpop.permute.xlu0 %1255
    %1257 = vrot.lane.b32.xlu0 %v1250, 126
    %v1258 = vpop.permute.xlu0 %1257
    %v1263 = vadd.f32 %v1223, %v1252
    %v1264 = vadd.f32 %v1224, %v1254
    %v1265 = vadd.f32 %v1225, %v1256
    %v1266 = vadd.f32 %v1226, %v1258
    %s1267 = sld [smem:[#allocation7 + $0x186]]
    %v1268 = vstv %s1267
    %v1269 = vmul.f32 %v1091, %v1268
    %v1270 = vmul.f32 %v1092, %v1268
    %v1271 = vmul.f32 %v1093, %v1268
    %v1272 = vmul.f32 %v1094, %v1268
    %v1273 = vmul.f32 %v1095, %v1268
    %v1274 = vmul.f32 %v1096, %v1268
    %v1281 = vrot.slane %v1269, 2
    %v1282 = vrot.slane %v1270, 2
    %v1283 = vsel %vm413, %v1281, %v1282
    %v1284 = vrot.slane %v1271, 2
    %v1285 = vsel %vm413, %v1282, %v1284
    %v1286 = vrot.slane %v1272, 2
    %v1287 = vrot.slane %v1273, 2
    %v1288 = vsel %vm413, %v1286, %v1287
    %v1289 = vrot.slane %v1274, 2
    %v1290 = vsel %vm413, %v1287, %v1289
    %v1295 = vadd.f32 %v1263, %v1283
    %v1296 = vadd.f32 %v1264, %v1285
    %v1297 = vadd.f32 %v1265, %v1288
    %v1298 = vadd.f32 %v1266, %v1290
    %s1299 = sld [smem:[#allocation7 + $0x187]]
    %v1300 = vstv %s1299
    %v1301 = vmul.f32 %v1091, %v1300
    %v1302 = vmul.f32 %v1092, %v1300
    %v1303 = vmul.f32 %v1093, %v1300
    %v1304 = vmul.f32 %v1094, %v1300
    %v1305 = vmul.f32 %v1095, %v1300
    %v1306 = vmul.f32 %v1096, %v1300
    %v1313 = vrot.slane %v1301, 2
    %v1314 = vrot.slane %v1302, 2
    %v1315 = vsel %vm413, %v1313, %v1314
    %v1316 = vrot.slane %v1303, 2
    %v1317 = vsel %vm413, %v1314, %v1316
    %v1318 = vrot.slane %v1304, 2
    %v1319 = vrot.slane %v1305, 2
    %v1320 = vsel %vm413, %v1318, %v1319
    %v1321 = vrot.slane %v1306, 2
    %v1322 = vsel %vm413, %v1319, %v1321
    %1323 = vrot.lane.b32.xlu0 %v1315, 127
    %v1324 = vpop.permute.xlu0 %1323
    %1325 = vrot.lane.b32.xlu0 %v1317, 127
    %v1326 = vpop.permute.xlu0 %1325
    %1327 = vrot.lane.b32.xlu0 %v1320, 127
    %v1328 = vpop.permute.xlu0 %1327
    %1329 = vrot.lane.b32.xlu0 %v1322, 127
    %v1330 = vpop.permute.xlu0 %1329
    %v1335 = vadd.f32 %v1295, %v1324
    %v1336 = vadd.f32 %v1296, %v1326
    %v1337 = vadd.f32 %v1297, %v1328
    %v1338 = vadd.f32 %v1298, %v1330
    %s1339 = sld [smem:[#allocation7 + $0x188]]
    %v1340 = vstv %s1339
    %v1341 = vmul.f32 %v1091, %v1340
    %v1342 = vmul.f32 %v1092, %v1340
    %v1343 = vmul.f32 %v1093, %v1340
    %v1344 = vmul.f32 %v1094, %v1340
    %v1345 = vmul.f32 %v1095, %v1340
    %v1346 = vmul.f32 %v1096, %v1340
    %v1353 = vrot.slane %v1341, 2
    %v1354 = vrot.slane %v1342, 2
    %v1355 = vsel %vm413, %v1353, %v1354
    %v1356 = vrot.slane %v1343, 2
    %v1357 = vsel %vm413, %v1354, %v1356
    %v1358 = vrot.slane %v1344, 2
    %v1359 = vrot.slane %v1345, 2
    %v1360 = vsel %vm413, %v1358, %v1359
    %v1361 = vrot.slane %v1346, 2
    %v1362 = vsel %vm413, %v1359, %v1361
    %1363 = vrot.lane.b32.xlu0 %v1355, 126
    %v1364 = vpop.permute.xlu0 %1363
    %1365 = vrot.lane.b32.xlu0 %v1357, 126
    %v1366 = vpop.permute.xlu0 %1365
    %1367 = vrot.lane.b32.xlu0 %v1360, 126
    %v1368 = vpop.permute.xlu0 %1367
    %1369 = vrot.lane.b32.xlu0 %v1362, 126
    %v1370 = vpop.permute.xlu0 %1369
    %v1375 = vadd.f32 %v1335, %v1364
    %v1376 = vadd.f32 %v1336, %v1366
    %v1377 = vadd.f32 %v1337, %v1368
    %v1378 = vadd.f32 %v1338, %v1370
    %s1379 = sld [smem:[#allocation8]]
    %v1380 = vstv %s1379
    %v1381 = vmul.f32 %v508, %v1380
    %v1382 = vmul.f32 %v509, %v1380
    %v1383 = vmul.f32 %v510, %v1380
    %v1384 = vmul.f32 %v511, %v1380
    %s1385 = sld [smem:[#allocation8 + $0x1]]
    %v1386 = vstv %s1385
    %v1387 = vmul.f32 %v797, %v1386
    %v1388 = vmul.f32 %v798, %v1386
    %v1389 = vmul.f32 %v799, %v1386
    %v1390 = vmul.f32 %v800, %v1386
    %v1391 = vadd.f32 %v1381, %v1387
    %v1392 = vadd.f32 %v1382, %v1388
    %v1393 = vadd.f32 %v1383, %v1389
    %v1394 = vadd.f32 %v1384, %v1390
    %s1395 = sld [smem:[#allocation8 + $0x2]]
    %v1396 = vstv %s1395
    %v1397 = vmul.f32 %v1086, %v1396
    %v1398 = vmul.f32 %v1087, %v1396
    %v1399 = vmul.f32 %v1088, %v1396
    %v1400 = vmul.f32 %v1089, %v1396
    %v1401 = vadd.f32 %v1391, %v1397
    %v1402 = vadd.f32 %v1392, %v1398
    %v1403 = vadd.f32 %v1393, %v1399
    %v1404 = vadd.f32 %v1394, %v1400
    %s1405 = sld [smem:[#allocation8 + $0x3]]
    %v1406 = vstv %s1405
    %v1407 = vmul.f32 %v1375, %v1406
    %v1408 = vmul.f32 %v1376, %v1406
    %v1409 = vmul.f32 %v1377, %v1406
    %v1410 = vmul.f32 %v1378, %v1406
    %v1411 = vadd.f32 %v1401, %v1407
    %v1412 = vadd.f32 %v1402, %v1408
    %v1413 = vadd.f32 %v1403, %v1409
    %v1414 = vadd.f32 %v1404, %v1410
    %vm1415 = vcmask 130048
    %v1416 = vsel %vm1415, %v1411, 0.0
    %v1417 = vsel %vm1415, %v1412, 0.0
    %v1418 = vadd.f32 %v1416, %v1417
    %v1419 = vsel %vm1415, %v1413, 0.0
    %v1420 = vadd.f32 %v1418, %v1419
    %v1421 = vsel %vm1415, %v1414, 0.0
    %v1422 = vadd.f32 %v1420, %v1421
    %1423 = vadd.xlane.f32.xlu0 %v1422
    %v1424 = vpop.xlane.xlu0 %1423
    %v1425 = vrot.slane %v1424, 4
    %v1426 = vadd.f32 %v1424, %v1425
    %v1427 = vrot.slane %v1426, 2
    %v1428 = vadd.f32 %v1426, %v1427
    %v1429 = vrot.slane %v1428, 1
    %v1430 = vadd.f32 %v1428, %v1429
    %s1431 = vtos %v1430
    %s1432 = smul.f32 %s1431, 0.001953125
    %v1433 = vstv %s1432
    %v1434 = vsub.f32 %v1411, %v1433
    %v1435 = vsub.f32 %v1412, %v1433
    %v1436 = vsub.f32 %v1413, %v1433
    %v1437 = vsub.f32 %v1414, %v1433
    %v1438 = vmul.f32 %v1434, %v1434
    %v1439 = vmul.f32 %v1435, %v1435
    %v1440 = vmul.f32 %v1436, %v1436
    %v1441 = vmul.f32 %v1437, %v1437
    %v1442 = vsel %vm1415, %v1438, 0.0
    %v1443 = vsel %vm1415, %v1439, 0.0
    %v1444 = vadd.f32 %v1442, %v1443
    %v1445 = vsel %vm1415, %v1440, 0.0
    %v1446 = vadd.f32 %v1444, %v1445
    %v1447 = vsel %vm1415, %v1441, 0.0
    %v1448 = vadd.f32 %v1446, %v1447
    %1449 = vadd.xlane.f32.xlu0 %v1448
    %v1450 = vpop.xlane.xlu0 %1449
    %v1451 = vrot.slane %v1450, 4
    %v1452 = vadd.f32 %v1450, %v1451
    %v1453 = vrot.slane %v1452, 2
    %v1454 = vadd.f32 %v1452, %v1453
    %v1455 = vrot.slane %v1454, 1
    %v1456 = vadd.f32 %v1454, %v1455
    %s1457 = vtos %v1456
    %s1458 = smul.f32 %s1457, 0.001953125
    %s1459 = sld [smem:[#allocation10]]
    %s1460 = sadd.f32 %s1458, 1e-05
    %v1461 = vstv %s1460
    %v1462 = vrsqrt.pop %v1461
    %v1463 = vmul.f32 %v1462, %v1461
    %v1464 = vmul.f32 %v1463, %v1462
    %v1465 = vmul.f32 0.5, %v1464
    %v1466 = vsub.f32 1.5, %v1465
    %v1467 = vmul.f32 %v1462, %v1466
    %vm1468 = vweird.f32 %v1461
    %vm1469 = vweird.f32 %v1462
    %vm1470 = vmor %vm1468, %vm1469
    %v1471 = vsel %vm1470, %v1462, %v1467
    %s1472 = vtos %v1471
    %s1473 = smul.f32 %s1459, %s1472
    %v1474 = vstv %s1473
    %v1475 = vmul.f32 %v1434, %v1474
    %v1476 = vmul.f32 %v1435, %v1474
    %v1477 = vmul.f32 %v1436, %v1474
    %v1478 = vmul.f32 %v1437, %v1474
    %s1479 = sld [smem:[#allocation11]]
    %v1480 = vstv %s1479
    %v1481 = vadd.f32 %v1475, %v1480
    %v1482 = vadd.f32 %v1476, %v1480
    %v1483 = vadd.f32 %v1477, %v1480
    %v1484 = vadd.f32 %v1478, %v1480
    %vm1485 = vcmp.ge.f32.partialorder %v1481, 0.0
    %vm1486 = vcmp.ge.f32.partialorder %v1482, 0.0
    %vm1487 = vcmp.ge.f32.partialorder %v1483, 0.0
    %vm1488 = vcmp.ge.f32.partialorder %v1484, 0.0
    %s1489 = sld [smem:[#allocation13]]
    %v1490 = vstv %s1489
    %v1491 = vmul.f32 %v1481, %v1490
    %v1492 = vmul.f32 %v1482, %v1490
    %v1493 = vmul.f32 %v1483, %v1490
    %v1494 = vmul.f32 %v1484, %v1490
    %v1495 = vsel %vm1485, %v1481, %v1491
    %v1496 = vsel %vm1486, %v1482, %v1492
    %v1497 = vsel %vm1487, %v1483, %v1493
    %v1498 = vsel %vm1488, %v1484, %v1494
    %1499 = vst.msk [vmem:[#allocation14] sm:$0xff] %vm1415, %v1495
    %1500 = vst.msk [vmem:[#allocation14 + $0x8] sm:$0xff] %vm1415, %v1496
    %1501 = vst.msk [vmem:[#allocation14 + $0x80] sm:$0xff] %vm1415, %v1497
    %1502 = vst.msk [vmem:[#allocation14 + $0x88] sm:$0xff] %vm1415, %v1498
    %s1503 = sld [smem:[#allocation8 + $0x80]]
    %v1504 = vstv %s1503
    %v1505 = vmul.f32 %v508, %v1504
    %v1506 = vmul.f32 %v509, %v1504
    %v1507 = vmul.f32 %v510, %v1504
    %v1508 = vmul.f32 %v511, %v1504
    %s1509 = sld [smem:[#allocation8 + $0x81]]
    %v1510 = vstv %s1509
    %v1511 = vmul.f32 %v797, %v1510
    %v1512 = vmul.f32 %v798, %v1510
    %v1513 = vmul.f32 %v799, %v1510
    %v1514 = vmul.f32 %v800, %v1510
    %v1515 = vadd.f32 %v1505, %v1511
    %v1516 = vadd.f32 %v1506, %v1512
    %v1517 = vadd.f32 %v1507, %v1513
    %v1518 = vadd.f32 %v1508, %v1514
    %s1519 = sld [smem:[#allocation8 + $0x82]]
    %v1520 = vstv %s1519
    %v1521 = vmul.f32 %v1086, %v1520
    %v1522 = vmul.f32 %v1087, %v1520
    %v1523 = vmul.f32 %v1088, %v1520
    %v1524 = vmul.f32 %v1089, %v1520
    %v1525 = vadd.f32 %v1515, %v1521
    %v1526 = vadd.f32 %v1516, %v1522
    %v1527 = vadd.f32 %v1517, %v1523
    %v1528 = vadd.f32 %v1518, %v1524
    %s1529 = sld [smem:[#allocation8 + $0x83]]
    %v1530 = vstv %s1529
    %v1531 = vmul.f32 %v1375, %v1530
    %v1532 = vmul.f32 %v1376, %v1530
    %v1533 = vmul.f32 %v1377, %v1530
    %v1534 = vmul.f32 %v1378, %v1530
    %v1535 = vadd.f32 %v1525, %v1531
    %v1536 = vadd.f32 %v1526, %v1532
    %v1537 = vadd.f32 %v1527, %v1533
    %v1538 = vadd.f32 %v1528, %v1534
    %v1539 = vsel %vm1415, %v1535, 0.0
    %v1540 = vsel %vm1415, %v1536, 0.0
    %v1541 = vadd.f32 %v1539, %v1540
    %v1542 = vsel %vm1415, %v1537, 0.0
    %v1543 = vadd.f32 %v1541, %v1542
    %v1544 = vsel %vm1415, %v1538, 0.0
    %v1545 = vadd.f32 %v1543, %v1544
    %1546 = vadd.xlane.f32.xlu0 %v1545
    %v1547 = vpop.xlane.xlu0 %1546
    %v1548 = vrot.slane %v1547, 4
    %v1549 = vadd.f32 %v1547, %v1548
    %v1550 = vrot.slane %v1549, 2
    %v1551 = vadd.f32 %v1549, %v1550
    %v1552 = vrot.slane %v1551, 1
    %v1553 = vadd.f32 %v1551, %v1552
    %s1554 = vtos %v1553
    %s1555 = smul.f32 %s1554, 0.001953125
    %v1556 = vstv %s1555
    %v1557 = vsub.f32 %v1535, %v1556
    %v1558 = vsub.f32 %v1536, %v1556
    %v1559 = vsub.f32 %v1537, %v1556
    %v1560 = vsub.f32 %v1538, %v1556
    %v1561 = vmul.f32 %v1557, %v1557
    %v1562 = vmul.f32 %v1558, %v1558
    %v1563 = vmul.f32 %v1559, %v1559
    %v1564 = vmul.f32 %v1560, %v1560
    %v1565 = vsel %vm1415, %v1561, 0.0
    %v1566 = vsel %vm1415, %v1562, 0.0
    %v1567 = vadd.f32 %v1565, %v1566
    %v1568 = vsel %vm1415, %v1563, 0.0
    %v1569 = vadd.f32 %v1567, %v1568
    %v1570 = vsel %vm1415, %v1564, 0.0
    %v1571 = vadd.f32 %v1569, %v1570
    %1572 = vadd.xlane.f32.xlu0 %v1571
    %v1573 = vpop.xlane.xlu0 %1572
    %v1574 = vrot.slane %v1573, 4
    %v1575 = vadd.f32 %v1573, %v1574
    %v1576 = vrot.slane %v1575, 2
    %v1577 = vadd.f32 %v1575, %v1576
    %v1578 = vrot.slane %v1577, 1
    %v1579 = vadd.f32 %v1577, %v1578
    %s1580 = vtos %v1579
    %s1581 = smul.f32 %s1580, 0.001953125
    %s1582 = sld [smem:[#allocation10 + $0x1]]
    %s1583 = sadd.f32 %s1581, 1e-05
    %v1584 = vstv %s1583
    %v1585 = vrsqrt.pop %v1584
    %v1586 = vmul.f32 %v1585, %v1584
    %v1587 = vmul.f32 %v1586, %v1585
    %v1588 = vmul.f32 0.5, %v1587
    %v1589 = vsub.f32 1.5, %v1588
    %v1590 = vmul.f32 %v1585, %v1589
    %vm1591 = vweird.f32 %v1584
    %vm1592 = vweird.f32 %v1585
    %vm1593 = vmor %vm1591, %vm1592
    %v1594 = vsel %vm1593, %v1585, %v1590
    %s1595 = vtos %v1594
    %s1596 = smul.f32 %s1582, %s1595
    %v1597 = vstv %s1596
    %v1598 = vmul.f32 %v1557, %v1597
    %v1599 = vmul.f32 %v1558, %v1597
    %v1600 = vmul.f32 %v1559, %v1597
    %v1601 = vmul.f32 %v1560, %v1597
    %s1602 = sld [smem:[#allocation11 + $0x1]]
    %v1603 = vstv %s1602
    %v1604 = vadd.f32 %v1598, %v1603
    %v1605 = vadd.f32 %v1599, %v1603
    %v1606 = vadd.f32 %v1600, %v1603
    %v1607 = vadd.f32 %v1601, %v1603
    %vm1608 = vcmp.ge.f32.partialorder %v1604, 0.0
    %vm1609 = vcmp.ge.f32.partialorder %v1605, 0.0
    %vm1610 = vcmp.ge.f32.partialorder %v1606, 0.0
    %vm1611 = vcmp.ge.f32.partialorder %v1607, 0.0
    %s1612 = sld [smem:[#allocation13 + $0x1]]
    %v1613 = vstv %s1612
    %v1614 = vmul.f32 %v1604, %v1613
    %v1615 = vmul.f32 %v1605, %v1613
    %v1616 = vmul.f32 %v1606, %v1613
    %v1617 = vmul.f32 %v1607, %v1613
    %v1618 = vsel %vm1608, %v1604, %v1614
    %v1619 = vsel %vm1609, %v1605, %v1615
    %v1620 = vsel %vm1610, %v1606, %v1616
    %v1621 = vsel %vm1611, %v1607, %v1617
    %s1622 = scalar_lea.vmem [#allocation14], 16
    %1623 = vst.msk [vmem:[%s1622] sm:$0xff] %vm1415, %v1618
    %1624 = vst.msk [vmem:[%s1622 + $0x8] sm:$0xff] %vm1415, %v1619
    %1625 = vst.msk [vmem:[%s1622 + $0x80] sm:$0xff] %vm1415, %v1620
    %1626 = vst.msk [vmem:[%s1622 + $0x88] sm:$0xff] %vm1415, %v1621
    %s1627 = sld [smem:[#allocation8 + $0x100]]
    %v1628 = vstv %s1627
    %v1629 = vmul.f32 %v508, %v1628
    %v1630 = vmul.f32 %v509, %v1628
    %v1631 = vmul.f32 %v510, %v1628
    %v1632 = vmul.f32 %v511, %v1628
    %s1633 = sld [smem:[#allocation8 + $0x101]]
    %v1634 = vstv %s1633
    %v1635 = vmul.f32 %v797, %v1634
    %v1636 = vmul.f32 %v798, %v1634
    %v1637 = vmul.f32 %v799, %v1634
    %v1638 = vmul.f32 %v800, %v1634
    %v1639 = vadd.f32 %v1629, %v1635
    %v1640 = vadd.f32 %v1630, %v1636
    %v1641 = vadd.f32 %v1631, %v1637
    %v1642 = vadd.f32 %v1632, %v1638
    %s1643 = sld [smem:[#allocation8 + $0x102]]
    %v1644 = vstv %s1643
    %v1645 = vmul.f32 %v1086, %v1644
    %v1646 = vmul.f32 %v1087, %v1644
    %v1647 = vmul.f32 %v1088, %v1644
    %v1648 = vmul.f32 %v1089, %v1644
    %v1649 = vadd.f32 %v1639, %v1645
    %v1650 = vadd.f32 %v1640, %v1646
    %v1651 = vadd.f32 %v1641, %v1647
    %v1652 = vadd.f32 %v1642, %v1648
    %s1653 = sld [smem:[#allocation8 + $0x103]]
    %v1654 = vstv %s1653
    %v1655 = vmul.f32 %v1375, %v1654
    %v1656 = vmul.f32 %v1376, %v1654
    %v1657 = vmul.f32 %v1377, %v1654
    %v1658 = vmul.f32 %v1378, %v1654
    %v1659 = vadd.f32 %v1649, %v1655
    %v1660 = vadd.f32 %v1650, %v1656
    %v1661 = vadd.f32 %v1651, %v1657
    %v1662 = vadd.f32 %v1652, %v1658
    %v1663 = vsel %vm1415, %v1659, 0.0
    %v1664 = vsel %vm1415, %v1660, 0.0
    %v1665 = vadd.f32 %v1663, %v1664
    %v1666 = vsel %vm1415, %v1661, 0.0
    %v1667 = vadd.f32 %v1665, %v1666
    %v1668 = vsel %vm1415, %v1662, 0.0
    %v1669 = vadd.f32 %v1667, %v1668
    %1670 = vadd.xlane.f32.xlu0 %v1669
    %v1671 = vpop.xlane.xlu0 %1670
    %v1672 = vrot.slane %v1671, 4
    %v1673 = vadd.f32 %v1671, %v1672
    %v1674 = vrot.slane %v1673, 2
    %v1675 = vadd.f32 %v1673, %v1674
    %v1676 = vrot.slane %v1675, 1
    %v1677 = vadd.f32 %v1675, %v1676
    %s1678 = vtos %v1677
    %s1679 = smul.f32 %s1678, 0.001953125
    %v1680 = vstv %s1679
    %v1681 = vsub.f32 %v1659, %v1680
    %v1682 = vsub.f32 %v1660, %v1680
    %v1683 = vsub.f32 %v1661, %v1680
    %v1684 = vsub.f32 %v1662, %v1680
    %v1685 = vmul.f32 %v1681, %v1681
    %v1686 = vmul.f32 %v1682, %v1682
    %v1687 = vmul.f32 %v1683, %v1683
    %v1688 = vmul.f32 %v1684, %v1684
    %v1689 = vsel %vm1415, %v1685, 0.0
    %v1690 = vsel %vm1415, %v1686, 0.0
    %v1691 = vadd.f32 %v1689, %v1690
    %v1692 = vsel %vm1415, %v1687, 0.0
    %v1693 = vadd.f32 %v1691, %v1692
    %v1694 = vsel %vm1415, %v1688, 0.0
    %v1695 = vadd.f32 %v1693, %v1694
    %1696 = vadd.xlane.f32.xlu0 %v1695
    %v1697 = vpop.xlane.xlu0 %1696
    %v1698 = vrot.slane %v1697, 4
    %v1699 = vadd.f32 %v1697, %v1698
    %v1700 = vrot.slane %v1699, 2
    %v1701 = vadd.f32 %v1699, %v1700
    %v1702 = vrot.slane %v1701, 1
    %v1703 = vadd.f32 %v1701, %v1702
    %s1704 = vtos %v1703
    %s1705 = smul.f32 %s1704, 0.001953125
    %s1706 = sld [smem:[#allocation10 + $0x2]]
    %s1707 = sadd.f32 %s1705, 1e-05
    %v1708 = vstv %s1707
    %v1709 = vrsqrt.pop %v1708
    %v1710 = vmul.f32 %v1709, %v1708
    %v1711 = vmul.f32 %v1710, %v1709
    %v1712 = vmul.f32 0.5, %v1711
    %v1713 = vsub.f32 1.5, %v1712
    %v1714 = vmul.f32 %v1709, %v1713
    %vm1715 = vweird.f32 %v1708
    %vm1716 = vweird.f32 %v1709
    %vm1717 = vmor %vm1715, %vm1716
    %v1718 = vsel %vm1717, %v1709, %v1714
    %s1719 = vtos %v1718
    %s1720 = smul.f32 %s1706, %s1719
    %v1721 = vstv %s1720
    %v1722 = vmul.f32 %v1681, %v1721
    %v1723 = vmul.f32 %v1682, %v1721
    %v1724 = vmul.f32 %v1683, %v1721
    %v1725 = vmul.f32 %v1684, %v1721
    %s1726 = sld [smem:[#allocation11 + $0x2]]
    %v1727 = vstv %s1726
    %v1728 = vadd.f32 %v1722, %v1727
    %v1729 = vadd.f32 %v1723, %v1727
    %v1730 = vadd.f32 %v1724, %v1727
    %v1731 = vadd.f32 %v1725, %v1727
    %vm1732 = vcmp.ge.f32.partialorder %v1728, 0.0
    %vm1733 = vcmp.ge.f32.partialorder %v1729, 0.0
    %vm1734 = vcmp.ge.f32.partialorder %v1730, 0.0
    %vm1735 = vcmp.ge.f32.partialorder %v1731, 0.0
    %s1736 = sld [smem:[#allocation13 + $0x2]]
    %v1737 = vstv %s1736
    %v1738 = vmul.f32 %v1728, %v1737
    %v1739 = vmul.f32 %v1729, %v1737
    %v1740 = vmul.f32 %v1730, %v1737
    %v1741 = vmul.f32 %v1731, %v1737
    %v1742 = vsel %vm1732, %v1728, %v1738
    %v1743 = vsel %vm1733, %v1729, %v1739
    %v1744 = vsel %vm1734, %v1730, %v1740
    %v1745 = vsel %vm1735, %v1731, %v1741
    %s1746 = scalar_lea.vmem [#allocation14], 32
    %1747 = vst.msk [vmem:[%s1746] sm:$0xff] %vm1415, %v1742
    %1748 = vst.msk [vmem:[%s1746 + $0x8] sm:$0xff] %vm1415, %v1743
    %1749 = vst.msk [vmem:[%s1746 + $0x80] sm:$0xff] %vm1415, %v1744
    %1750 = vst.msk [vmem:[%s1746 + $0x88] sm:$0xff] %vm1415, %v1745
    %s1751 = sld [smem:[#allocation8 + $0x180]]
    %v1752 = vstv %s1751
    %v1753 = vmul.f32 %v508, %v1752
    %v1754 = vmul.f32 %v509, %v1752
    %v1755 = vmul.f32 %v510, %v1752
    %v1756 = vmul.f32 %v511, %v1752
    %s1757 = sld [smem:[#allocation8 + $0x181]]
    %v1758 = vstv %s1757
    %v1759 = vmul.f32 %v797, %v1758
    %v1760 = vmul.f32 %v798, %v1758
    %v1761 = vmul.f32 %v799, %v1758
    %v1762 = vmul.f32 %v800, %v1758
    %v1763 = vadd.f32 %v1753, %v1759
    %v1764 = vadd.f32 %v1754, %v1760
    %v1765 = vadd.f32 %v1755, %v1761
    %v1766 = vadd.f32 %v1756, %v1762
    %s1767 = sld [smem:[#allocation8 + $0x182]]
    %v1768 = vstv %s1767
    %v1769 = vmul.f32 %v1086, %v1768
    %v1770 = vmul.f32 %v1087, %v1768
    %v1771 = vmul.f32 %v1088, %v1768
    %v1772 = vmul.f32 %v1089, %v1768
    %v1773 = vadd.f32 %v1763, %v1769
    %v1774 = vadd.f32 %v1764, %v1770
    %v1775 = vadd.f32 %v1765, %v1771
    %v1776 = vadd.f32 %v1766, %v1772
    %s1777 = sld [smem:[#allocation8 + $0x183]]
    %v1778 = vstv %s1777
    %v1779 = vmul.f32 %v1375, %v1778
    %v1780 = vmul.f32 %v1376, %v1778
    %v1781 = vmul.f32 %v1377, %v1778
    %v1782 = vmul.f32 %v1378, %v1778
    %v1783 = vadd.f32 %v1773, %v1779
    %v1784 = vadd.f32 %v1774, %v1780
    %v1785 = vadd.f32 %v1775, %v1781
    %v1786 = vadd.f32 %v1776, %v1782
    %v1787 = vsel %vm1415, %v1783, 0.0
    %v1788 = vsel %vm1415, %v1784, 0.0
    %v1789 = vadd.f32 %v1787, %v1788
    %v1790 = vsel %vm1415, %v1785, 0.0
    %v1791 = vadd.f32 %v1789, %v1790
    %v1792 = vsel %vm1415, %v1786, 0.0
    %v1793 = vadd.f32 %v1791, %v1792
    %1794 = vadd.xlane.f32.xlu0 %v1793
    %v1795 = vpop.xlane.xlu0 %1794
    %v1796 = vrot.slane %v1795, 4
    %v1797 = vadd.f32 %v1795, %v1796
    %v1798 = vrot.slane %v1797, 2
    %v1799 = vadd.f32 %v1797, %v1798
    %v1800 = vrot.slane %v1799, 1
    %v1801 = vadd.f32 %v1799, %v1800
    %s1802 = vtos %v1801
    %s1803 = smul.f32 %s1802, 0.001953125
    %v1804 = vstv %s1803
    %v1805 = vsub.f32 %v1783, %v1804
    %v1806 = vsub.f32 %v1784, %v1804
    %v1807 = vsub.f32 %v1785, %v1804
    %v1808 = vsub.f32 %v1786, %v1804
    %v1809 = vmul.f32 %v1805, %v1805
    %v1810 = vmul.f32 %v1806, %v1806
    %v1811 = vmul.f32 %v1807, %v1807
    %v1812 = vmul.f32 %v1808, %v1808
    %v1813 = vsel %vm1415, %v1809, 0.0
    %v1814 = vsel %vm1415, %v1810, 0.0
    %v1815 = vadd.f32 %v1813, %v1814
    %v1816 = vsel %vm1415, %v1811, 0.0
    %v1817 = vadd.f32 %v1815, %v1816
    %v1818 = vsel %vm1415, %v1812, 0.0
    %v1819 = vadd.f32 %v1817, %v1818
    %1820 = vadd.xlane.f32.xlu0 %v1819
    %v1821 = vpop.xlane.xlu0 %1820
    %v1822 = vrot.slane %v1821, 4
    %v1823 = vadd.f32 %v1821, %v1822
    %v1824 = vrot.slane %v1823, 2
    %v1825 = vadd.f32 %v1823, %v1824
    %v1826 = vrot.slane %v1825, 1
    %v1827 = vadd.f32 %v1825, %v1826
    %s1828 = vtos %v1827
    %s1829 = smul.f32 %s1828, 0.001953125
    %s1830 = sld [smem:[#allocation10 + $0x3]]
    %s1831 = sadd.f32 %s1829, 1e-05
    %v1832 = vstv %s1831
    %v1833 = vrsqrt.pop %v1832
    %v1834 = vmul.f32 %v1833, %v1832
    %v1835 = vmul.f32 %v1834, %v1833
    %v1836 = vmul.f32 0.5, %v1835
    %v1837 = vsub.f32 1.5, %v1836
    %v1838 = vmul.f32 %v1833, %v1837
    %vm1839 = vweird.f32 %v1832
    %vm1840 = vweird.f32 %v1833
    %vm1841 = vmor %vm1839, %vm1840
    %v1842 = vsel %vm1841, %v1833, %v1838
    %s1843 = vtos %v1842
    %s1844 = smul.f32 %s1830, %s1843
    %v1845 = vstv %s1844
    %v1846 = vmul.f32 %v1805, %v1845
    %v1847 = vmul.f32 %v1806, %v1845
    %v1848 = vmul.f32 %v1807, %v1845
    %v1849 = vmul.f32 %v1808, %v1845
    %s1850 = sld [smem:[#allocation11 + $0x3]]
    %v1851 = vstv %s1850
    %v1852 = vadd.f32 %v1846, %v1851
    %v1853 = vadd.f32 %v1847, %v1851
    %v1854 = vadd.f32 %v1848, %v1851
    %v1855 = vadd.f32 %v1849, %v1851
    %vm1856 = vcmp.ge.f32.partialorder %v1852, 0.0
    %vm1857 = vcmp.ge.f32.partialorder %v1853, 0.0
    %vm1858 = vcmp.ge.f32.partialorder %v1854, 0.0
    %vm1859 = vcmp.ge.f32.partialorder %v1855, 0.0
    %s1860 = sld [smem:[#allocation13 + $0x3]]
    %v1861 = vstv %s1860
    %v1862 = vmul.f32 %v1852, %v1861
    %v1863 = vmul.f32 %v1853, %v1861
    %v1864 = vmul.f32 %v1854, %v1861
    %v1865 = vmul.f32 %v1855, %v1861
    %v1866 = vsel %vm1856, %v1852, %v1862
    %v1867 = vsel %vm1857, %v1853, %v1863
    %v1868 = vsel %vm1858, %v1854, %v1864
    %v1869 = vsel %vm1859, %v1855, %v1865
    %s1870 = scalar_lea.vmem [#allocation14], 48
    %1871 = vst.msk [vmem:[%s1870] sm:$0xff] %vm1415, %v1866
    %1872 = vst.msk [vmem:[%s1870 + $0x8] sm:$0xff] %vm1415, %v1867
    %1873 = vst.msk [vmem:[%s1870 + $0x80] sm:$0xff] %vm1415, %v1868
    %1874 = vst.msk [vmem:[%s1870 + $0x88] sm:$0xff] %vm1415, %v1869
    %s1875 = sld [smem:[#allocation8 + $0x200]]
    %v1876 = vstv %s1875
    %v1877 = vmul.f32 %v508, %v1876
    %v1878 = vmul.f32 %v509, %v1876
    %v1879 = vmul.f32 %v510, %v1876
    %v1880 = vmul.f32 %v511, %v1876
    %s1881 = sld [smem:[#allocation8 + $0x201]]
    %v1882 = vstv %s1881
    %v1883 = vmul.f32 %v797, %v1882
    %v1884 = vmul.f32 %v798, %v1882
    %v1885 = vmul.f32 %v799, %v1882
    %v1886 = vmul.f32 %v800, %v1882
    %v1887 = vadd.f32 %v1877, %v1883
    %v1888 = vadd.f32 %v1878, %v1884
    %v1889 = vadd.f32 %v1879, %v1885
    %v1890 = vadd.f32 %v1880, %v1886
    %s1891 = sld [smem:[#allocation8 + $0x202]]
    %v1892 = vstv %s1891
    %v1893 = vmul.f32 %v1086, %v1892
    %v1894 = vmul.f32 %v1087, %v1892
    %v1895 = vmul.f32 %v1088, %v1892
    %v1896 = vmul.f32 %v1089, %v1892
    %v1897 = vadd.f32 %v1887, %v1893
    %v1898 = vadd.f32 %v1888, %v1894
    %v1899 = vadd.f32 %v1889, %v1895
    %v1900 = vadd.f32 %v1890, %v1896
    %s1901 = sld [smem:[#allocation8 + $0x203]]
    %v1902 = vstv %s1901
    %v1903 = vmul.f32 %v1375, %v1902
    %v1904 = vmul.f32 %v1376, %v1902
    %v1905 = vmul.f32 %v1377, %v1902
    %v1906 = vmul.f32 %v1378, %v1902
    %v1907 = vadd.f32 %v1897, %v1903
    %v1908 = vadd.f32 %v1898, %v1904
    %v1909 = vadd.f32 %v1899, %v1905
    %v1910 = vadd.f32 %v1900, %v1906
    %v1911 = vsel %vm1415, %v1907, 0.0
    %v1912 = vsel %vm1415, %v1908, 0.0
    %v1913 = vadd.f32 %v1911, %v1912
    %v1914 = vsel %vm1415, %v1909, 0.0
    %v1915 = vadd.f32 %v1913, %v1914
    %v1916 = vsel %vm1415, %v1910, 0.0
    %v1917 = vadd.f32 %v1915, %v1916
    %1918 = vadd.xlane.f32.xlu0 %v1917
    %v1919 = vpop.xlane.xlu0 %1918
    %v1920 = vrot.slane %v1919, 4
    %v1921 = vadd.f32 %v1919, %v1920
    %v1922 = vrot.slane %v1921, 2
    %v1923 = vadd.f32 %v1921, %v1922
    %v1924 = vrot.slane %v1923, 1
    %v1925 = vadd.f32 %v1923, %v1924
    %s1926 = vtos %v1925
    %s1927 = smul.f32 %s1926, 0.001953125
    %v1928 = vstv %s1927
    %v1929 = vsub.f32 %v1907, %v1928
    %v1930 = vsub.f32 %v1908, %v1928
    %v1931 = vsub.f32 %v1909, %v1928
    %v1932 = vsub.f32 %v1910, %v1928
    %v1933 = vmul.f32 %v1929, %v1929
    %v1934 = vmul.f32 %v1930, %v1930
    %v1935 = vmul.f32 %v1931, %v1931
    %v1936 = vmul.f32 %v1932, %v1932
    %v1937 = vsel %vm1415, %v1933, 0.0
    %v1938 = vsel %vm1415, %v1934, 0.0
    %v1939 = vadd.f32 %v1937, %v1938
    %v1940 = vsel %vm1415, %v1935, 0.0
    %v1941 = vadd.f32 %v1939, %v1940
    %v1942 = vsel %vm1415, %v1936, 0.0
    %v1943 = vadd.f32 %v1941, %v1942
    %1944 = vadd.xlane.f32.xlu0 %v1943
    %v1945 = vpop.xlane.xlu0 %1944
    %v1946 = vrot.slane %v1945, 4
    %v1947 = vadd.f32 %v1945, %v1946
    %v1948 = vrot.slane %v1947, 2
    %v1949 = vadd.f32 %v1947, %v1948
    %v1950 = vrot.slane %v1949, 1
    %v1951 = vadd.f32 %v1949, %v1950
    %s1952 = vtos %v1951
    %s1953 = smul.f32 %s1952, 0.001953125
    %s1954 = sld [smem:[#allocation10 + $0x4]]
    %s1955 = sadd.f32 %s1953, 1e-05
    %v1956 = vstv %s1955
    %v1957 = vrsqrt.pop %v1956
    %v1958 = vmul.f32 %v1957, %v1956
    %v1959 = vmul.f32 %v1958, %v1957
    %v1960 = vmul.f32 0.5, %v1959
    %v1961 = vsub.f32 1.5, %v1960
    %v1962 = vmul.f32 %v1957, %v1961
    %vm1963 = vweird.f32 %v1956
    %vm1964 = vweird.f32 %v1957
    %vm1965 = vmor %vm1963, %vm1964
    %v1966 = vsel %vm1965, %v1957, %v1962
    %s1967 = vtos %v1966
    %s1968 = smul.f32 %s1954, %s1967
    %v1969 = vstv %s1968
    %v1970 = vmul.f32 %v1929, %v1969
    %v1971 = vmul.f32 %v1930, %v1969
    %v1972 = vmul.f32 %v1931, %v1969
    %v1973 = vmul.f32 %v1932, %v1969
    %s1974 = sld [smem:[#allocation11 + $0x4]]
    %v1975 = vstv %s1974
    %v1976 = vadd.f32 %v1970, %v1975
    %v1977 = vadd.f32 %v1971, %v1975
    %v1978 = vadd.f32 %v1972, %v1975
    %v1979 = vadd.f32 %v1973, %v1975
    %vm1980 = vcmp.ge.f32.partialorder %v1976, 0.0
    %vm1981 = vcmp.ge.f32.partialorder %v1977, 0.0
    %vm1982 = vcmp.ge.f32.partialorder %v1978, 0.0
    %vm1983 = vcmp.ge.f32.partialorder %v1979, 0.0
    %s1984 = sld [smem:[#allocation13 + $0x4]]
    %v1985 = vstv %s1984
    %v1986 = vmul.f32 %v1976, %v1985
    %v1987 = vmul.f32 %v1977, %v1985
    %v1988 = vmul.f32 %v1978, %v1985
    %v1989 = vmul.f32 %v1979, %v1985
    %v1990 = vsel %vm1980, %v1976, %v1986
    %v1991 = vsel %vm1981, %v1977, %v1987
    %v1992 = vsel %vm1982, %v1978, %v1988
    %v1993 = vsel %vm1983, %v1979, %v1989
    %s1994 = scalar_lea.vmem [#allocation14], 64
    %1995 = vst.msk [vmem:[%s1994] sm:$0xff] %vm1415, %v1990
    %1996 = vst.msk [vmem:[%s1994 + $0x8] sm:$0xff] %vm1415, %v1991
    %1997 = vst.msk [vmem:[%s1994 + $0x80] sm:$0xff] %vm1415, %v1992
    %1998 = vst.msk [vmem:[%s1994 + $0x88] sm:$0xff] %vm1415, %v1993
    %s1999 = sld [smem:[#allocation8 + $0x280]]
    %v2000 = vstv %s1999
    %v2001 = vmul.f32 %v508, %v2000
    %v2002 = vmul.f32 %v509, %v2000
    %v2003 = vmul.f32 %v510, %v2000
    %v2004 = vmul.f32 %v511, %v2000
    %s2005 = sld [smem:[#allocation8 + $0x281]]
    %v2006 = vstv %s2005
    %v2007 = vmul.f32 %v797, %v2006
    %v2008 = vmul.f32 %v798, %v2006
    %v2009 = vmul.f32 %v799, %v2006
    %v2010 = vmul.f32 %v800, %v2006
    %v2011 = vadd.f32 %v2001, %v2007
    %v2012 = vadd.f32 %v2002, %v2008
    %v2013 = vadd.f32 %v2003, %v2009
    %v2014 = vadd.f32 %v2004, %v2010
    %s2015 = sld [smem:[#allocation8 + $0x282]]
    %v2016 = vstv %s2015
    %v2017 = vmul.f32 %v1086, %v2016
    %v2018 = vmul.f32 %v1087, %v2016
    %v2019 = vmul.f32 %v1088, %v2016
    %v2020 = vmul.f32 %v1089, %v2016
    %v2021 = vadd.f32 %v2011, %v2017
    %v2022 = vadd.f32 %v2012, %v2018
    %v2023 = vadd.f32 %v2013, %v2019
    %v2024 = vadd.f32 %v2014, %v2020
    %s2025 = sld [smem:[#allocation8 + $0x283]]
    %v2026 = vstv %s2025
    %v2027 = vmul.f32 %v1375, %v2026
    %v2028 = vmul.f32 %v1376, %v2026
    %v2029 = vmul.f32 %v1377, %v2026
    %v2030 = vmul.f32 %v1378, %v2026
    %v2031 = vadd.f32 %v2021, %v2027
    %v2032 = vadd.f32 %v2022, %v2028
    %v2033 = vadd.f32 %v2023, %v2029
    %v2034 = vadd.f32 %v2024, %v2030
    %v2035 = vsel %vm1415, %v2031, 0.0
    %v2036 = vsel %vm1415, %v2032, 0.0
    %v2037 = vadd.f32 %v2035, %v2036
    %v2038 = vsel %vm1415, %v2033, 0.0
    %v2039 = vadd.f32 %v2037, %v2038
    %v2040 = vsel %vm1415, %v2034, 0.0
    %v2041 = vadd.f32 %v2039, %v2040
    %2042 = vadd.xlane.f32.xlu0 %v2041
    %v2043 = vpop.xlane.xlu0 %2042
    %v2044 = vrot.slane %v2043, 4
    %v2045 = vadd.f32 %v2043, %v2044
    %v2046 = vrot.slane %v2045, 2
    %v2047 = vadd.f32 %v2045, %v2046
    %v2048 = vrot.slane %v2047, 1
    %v2049 = vadd.f32 %v2047, %v2048
    %s2050 = vtos %v2049
    %s2051 = smul.f32 %s2050, 0.001953125
    %v2052 = vstv %s2051
    %v2053 = vsub.f32 %v2031, %v2052
    %v2054 = vsub.f32 %v2032, %v2052
    %v2055 = vsub.f32 %v2033, %v2052
    %v2056 = vsub.f32 %v2034, %v2052
    %v2057 = vmul.f32 %v2053, %v2053
    %v2058 = vmul.f32 %v2054, %v2054
    %v2059 = vmul.f32 %v2055, %v2055
    %v2060 = vmul.f32 %v2056, %v2056
    %v2061 = vsel %vm1415, %v2057, 0.0
    %v2062 = vsel %vm1415, %v2058, 0.0
    %v2063 = vadd.f32 %v2061, %v2062
    %v2064 = vsel %vm1415, %v2059, 0.0
    %v2065 = vadd.f32 %v2063, %v2064
    %v2066 = vsel %vm1415, %v2060, 0.0
    %v2067 = vadd.f32 %v2065, %v2066
    %2068 = vadd.xlane.f32.xlu0 %v2067
    %v2069 = vpop.xlane.xlu0 %2068
    %v2070 = vrot.slane %v2069, 4
    %v2071 = vadd.f32 %v2069, %v2070
    %v2072 = vrot.slane %v2071, 2
    %v2073 = vadd.f32 %v2071, %v2072
    %v2074 = vrot.slane %v2073, 1
    %v2075 = vadd.f32 %v2073, %v2074
    %s2076 = vtos %v2075
    %s2077 = smul.f32 %s2076, 0.001953125
    %s2078 = sld [smem:[#allocation10 + $0x5]]
    %s2079 = sadd.f32 %s2077, 1e-05
    %v2080 = vstv %s2079
    %v2081 = vrsqrt.pop %v2080
    %v2082 = vmul.f32 %v2081, %v2080
    %v2083 = vmul.f32 %v2082, %v2081
    %v2084 = vmul.f32 0.5, %v2083
    %v2085 = vsub.f32 1.5, %v2084
    %v2086 = vmul.f32 %v2081, %v2085
    %vm2087 = vweird.f32 %v2080
    %vm2088 = vweird.f32 %v2081
    %vm2089 = vmor %vm2087, %vm2088
    %v2090 = vsel %vm2089, %v2081, %v2086
    %s2091 = vtos %v2090
    %s2092 = smul.f32 %s2078, %s2091
    %v2093 = vstv %s2092
    %v2094 = vmul.f32 %v2053, %v2093
    %v2095 = vmul.f32 %v2054, %v2093
    %v2096 = vmul.f32 %v2055, %v2093
    %v2097 = vmul.f32 %v2056, %v2093
    %s2098 = sld [smem:[#allocation11 + $0x5]]
    %v2099 = vstv %s2098
    %v2100 = vadd.f32 %v2094, %v2099
    %v2101 = vadd.f32 %v2095, %v2099
    %v2102 = vadd.f32 %v2096, %v2099
    %v2103 = vadd.f32 %v2097, %v2099
    %vm2104 = vcmp.ge.f32.partialorder %v2100, 0.0
    %vm2105 = vcmp.ge.f32.partialorder %v2101, 0.0
    %vm2106 = vcmp.ge.f32.partialorder %v2102, 0.0
    %vm2107 = vcmp.ge.f32.partialorder %v2103, 0.0
    %s2108 = sld [smem:[#allocation13 + $0x5]]
    %v2109 = vstv %s2108
    %v2110 = vmul.f32 %v2100, %v2109
    %v2111 = vmul.f32 %v2101, %v2109
    %v2112 = vmul.f32 %v2102, %v2109
    %v2113 = vmul.f32 %v2103, %v2109
    %v2114 = vsel %vm2104, %v2100, %v2110
    %v2115 = vsel %vm2105, %v2101, %v2111
    %v2116 = vsel %vm2106, %v2102, %v2112
    %v2117 = vsel %vm2107, %v2103, %v2113
    %s2118 = scalar_lea.vmem [#allocation14], 80
    %2119 = vst.msk [vmem:[%s2118] sm:$0xff] %vm1415, %v2114
    %2120 = vst.msk [vmem:[%s2118 + $0x8] sm:$0xff] %vm1415, %v2115
    %2121 = vst.msk [vmem:[%s2118 + $0x80] sm:$0xff] %vm1415, %v2116
    %2122 = vst.msk [vmem:[%s2118 + $0x88] sm:$0xff] %vm1415, %v2117
    %s2123 = sld [smem:[#allocation8 + $0x300]]
    %v2124 = vstv %s2123
    %v2125 = vmul.f32 %v508, %v2124
    %v2126 = vmul.f32 %v509, %v2124
    %v2127 = vmul.f32 %v510, %v2124
    %v2128 = vmul.f32 %v511, %v2124
    %s2129 = sld [smem:[#allocation8 + $0x301]]
    %v2130 = vstv %s2129
    %v2131 = vmul.f32 %v797, %v2130
    %v2132 = vmul.f32 %v798, %v2130
    %v2133 = vmul.f32 %v799, %v2130
    %v2134 = vmul.f32 %v800, %v2130
    %v2135 = vadd.f32 %v2125, %v2131
    %v2136 = vadd.f32 %v2126, %v2132
    %v2137 = vadd.f32 %v2127, %v2133
    %v2138 = vadd.f32 %v2128, %v2134
    %s2139 = sld [smem:[#allocation8 + $0x302]]
    %v2140 = vstv %s2139
    %v2141 = vmul.f32 %v1086, %v2140
    %v2142 = vmul.f32 %v1087, %v2140
    %v2143 = vmul.f32 %v1088, %v2140
    %v2144 = vmul.f32 %v1089, %v2140
    %v2145 = vadd.f32 %v2135, %v2141
    %v2146 = vadd.f32 %v2136, %v2142
    %v2147 = vadd.f32 %v2137, %v2143
    %v2148 = vadd.f32 %v2138, %v2144
    %s2149 = sld [smem:[#allocation8 + $0x303]]
    %v2150 = vstv %s2149
    %v2151 = vmul.f32 %v1375, %v2150
    %v2152 = vmul.f32 %v1376, %v2150
    %v2153 = vmul.f32 %v1377, %v2150
    %v2154 = vmul.f32 %v1378, %v2150
    %v2155 = vadd.f32 %v2145, %v2151
    %v2156 = vadd.f32 %v2146, %v2152
    %v2157 = vadd.f32 %v2147, %v2153
    %v2158 = vadd.f32 %v2148, %v2154
    %v2159 = vsel %vm1415, %v2155, 0.0
    %v2160 = vsel %vm1415, %v2156, 0.0
    %v2161 = vadd.f32 %v2159, %v2160
    %v2162 = vsel %vm1415, %v2157, 0.0
    %v2163 = vadd.f32 %v2161, %v2162
    %v2164 = vsel %vm1415, %v2158, 0.0
    %v2165 = vadd.f32 %v2163, %v2164
    %2166 = vadd.xlane.f32.xlu0 %v2165
    %v2167 = vpop.xlane.xlu0 %2166
    %v2168 = vrot.slane %v2167, 4
    %v2169 = vadd.f32 %v2167, %v2168
    %v2170 = vrot.slane %v2169, 2
    %v2171 = vadd.f32 %v2169, %v2170
    %v2172 = vrot.slane %v2171, 1
    %v2173 = vadd.f32 %v2171, %v2172
    %s2174 = vtos %v2173
    %s2175 = smul.f32 %s2174, 0.001953125
    %v2176 = vstv %s2175
    %v2177 = vsub.f32 %v2155, %v2176
    %v2178 = vsub.f32 %v2156, %v2176
    %v2179 = vsub.f32 %v2157, %v2176
    %v2180 = vsub.f32 %v2158, %v2176
    %v2181 = vmul.f32 %v2177, %v2177
    %v2182 = vmul.f32 %v2178, %v2178
    %v2183 = vmul.f32 %v2179, %v2179
    %v2184 = vmul.f32 %v2180, %v2180
    %v2185 = vsel %vm1415, %v2181, 0.0
    %v2186 = vsel %vm1415, %v2182, 0.0
    %v2187 = vadd.f32 %v2185, %v2186
    %v2188 = vsel %vm1415, %v2183, 0.0
    %v2189 = vadd.f32 %v2187, %v2188
    %v2190 = vsel %vm1415, %v2184, 0.0
    %v2191 = vadd.f32 %v2189, %v2190
    %2192 = vadd.xlane.f32.xlu0 %v2191
    %v2193 = vpop.xlane.xlu0 %2192
    %v2194 = vrot.slane %v2193, 4
    %v2195 = vadd.f32 %v2193, %v2194
    %v2196 = vrot.slane %v2195, 2
    %v2197 = vadd.f32 %v2195, %v2196
    %v2198 = vrot.slane %v2197, 1
    %v2199 = vadd.f32 %v2197, %v2198
    %s2200 = vtos %v2199
    %s2201 = smul.f32 %s2200, 0.001953125
    %s2202 = sld [smem:[#allocation10 + $0x6]]
    %s2203 = sadd.f32 %s2201, 1e-05
    %v2204 = vstv %s2203
    %v2205 = vrsqrt.pop %v2204
    %v2206 = vmul.f32 %v2205, %v2204
    %v2207 = vmul.f32 %v2206, %v2205
    %v2208 = vmul.f32 0.5, %v2207
    %v2209 = vsub.f32 1.5, %v2208
    %v2210 = vmul.f32 %v2205, %v2209
    %vm2211 = vweird.f32 %v2204
    %vm2212 = vweird.f32 %v2205
    %vm2213 = vmor %vm2211, %vm2212
    %v2214 = vsel %vm2213, %v2205, %v2210
    %s2215 = vtos %v2214
    %s2216 = smul.f32 %s2202, %s2215
    %v2217 = vstv %s2216
    %v2218 = vmul.f32 %v2177, %v2217
    %v2219 = vmul.f32 %v2178, %v2217
    %v2220 = vmul.f32 %v2179, %v2217
    %v2221 = vmul.f32 %v2180, %v2217
    %s2222 = sld [smem:[#allocation11 + $0x6]]
    %v2223 = vstv %s2222
    %v2224 = vadd.f32 %v2218, %v2223
    %v2225 = vadd.f32 %v2219, %v2223
    %v2226 = vadd.f32 %v2220, %v2223
    %v2227 = vadd.f32 %v2221, %v2223
    %vm2228 = vcmp.ge.f32.partialorder %v2224, 0.0
    %vm2229 = vcmp.ge.f32.partialorder %v2225, 0.0
    %vm2230 = vcmp.ge.f32.partialorder %v2226, 0.0
    %vm2231 = vcmp.ge.f32.partialorder %v2227, 0.0
    %s2232 = sld [smem:[#allocation13 + $0x6]]
    %v2233 = vstv %s2232
    %v2234 = vmul.f32 %v2224, %v2233
    %v2235 = vmul.f32 %v2225, %v2233
    %v2236 = vmul.f32 %v2226, %v2233
    %v2237 = vmul.f32 %v2227, %v2233
    %v2238 = vsel %vm2228, %v2224, %v2234
    %v2239 = vsel %vm2229, %v2225, %v2235
    %v2240 = vsel %vm2230, %v2226, %v2236
    %v2241 = vsel %vm2231, %v2227, %v2237
    %s2242 = scalar_lea.vmem [#allocation14], 96
    %2243 = vst.msk [vmem:[%s2242] sm:$0xff] %vm1415, %v2238
    %2244 = vst.msk [vmem:[%s2242 + $0x8] sm:$0xff] %vm1415, %v2239
    %2245 = vst.msk [vmem:[%s2242 + $0x80] sm:$0xff] %vm1415, %v2240
    %2246 = vst.msk [vmem:[%s2242 + $0x88] sm:$0xff] %vm1415, %v2241
    %s2247 = sld [smem:[#allocation8 + $0x380]]
    %v2248 = vstv %s2247
    %v2249 = vmul.f32 %v508, %v2248
    %v2250 = vmul.f32 %v509, %v2248
    %v2251 = vmul.f32 %v510, %v2248
    %v2252 = vmul.f32 %v511, %v2248
    %s2253 = sld [smem:[#allocation8 + $0x381]]
    %v2254 = vstv %s2253
    %v2255 = vmul.f32 %v797, %v2254
    %v2256 = vmul.f32 %v798, %v2254
    %v2257 = vmul.f32 %v799, %v2254
    %v2258 = vmul.f32 %v800, %v2254
    %v2259 = vadd.f32 %v2249, %v2255
    %v2260 = vadd.f32 %v2250, %v2256
    %v2261 = vadd.f32 %v2251, %v2257
    %v2262 = vadd.f32 %v2252, %v2258
    %s2263 = sld [smem:[#allocation8 + $0x382]]
    %v2264 = vstv %s2263
    %v2265 = vmul.f32 %v1086, %v2264
    %v2266 = vmul.f32 %v1087, %v2264
    %v2267 = vmul.f32 %v1088, %v2264
    %v2268 = vmul.f32 %v1089, %v2264
    %v2269 = vadd.f32 %v2259, %v2265
    %v2270 = vadd.f32 %v2260, %v2266
    %v2271 = vadd.f32 %v2261, %v2267
    %v2272 = vadd.f32 %v2262, %v2268
    %s2273 = sld [smem:[#allocation8 + $0x383]]
    %v2274 = vstv %s2273
    %v2275 = vmul.f32 %v1375, %v2274
    %v2276 = vmul.f32 %v1376, %v2274
    %v2277 = vmul.f32 %v1377, %v2274
    %v2278 = vmul.f32 %v1378, %v2274
    %v2279 = vadd.f32 %v2269, %v2275
    %v2280 = vadd.f32 %v2270, %v2276
    %v2281 = vadd.f32 %v2271, %v2277
    %v2282 = vadd.f32 %v2272, %v2278
    %v2283 = vsel %vm1415, %v2279, 0.0
    %v2284 = vsel %vm1415, %v2280, 0.0
    %v2285 = vadd.f32 %v2283, %v2284
    %v2286 = vsel %vm1415, %v2281, 0.0
    %v2287 = vadd.f32 %v2285, %v2286
    %v2288 = vsel %vm1415, %v2282, 0.0
    %v2289 = vadd.f32 %v2287, %v2288
    %2290 = vadd.xlane.f32.xlu0 %v2289
    %v2291 = vpop.xlane.xlu0 %2290
    %v2292 = vrot.slane %v2291, 4
    %v2293 = vadd.f32 %v2291, %v2292
    %v2294 = vrot.slane %v2293, 2
    %v2295 = vadd.f32 %v2293, %v2294
    %v2296 = vrot.slane %v2295, 1
    %v2297 = vadd.f32 %v2295, %v2296
    %s2298 = vtos %v2297
    %s2299 = smul.f32 %s2298, 0.001953125
    %v2300 = vstv %s2299
    %v2301 = vsub.f32 %v2279, %v2300
    %v2302 = vsub.f32 %v2280, %v2300
    %v2303 = vsub.f32 %v2281, %v2300
    %v2304 = vsub.f32 %v2282, %v2300
    %v2305 = vmul.f32 %v2301, %v2301
    %v2306 = vmul.f32 %v2302, %v2302
    %v2307 = vmul.f32 %v2303, %v2303
    %v2308 = vmul.f32 %v2304, %v2304
    %v2309 = vsel %vm1415, %v2305, 0.0
    %v2310 = vsel %vm1415, %v2306, 0.0
    %v2311 = vadd.f32 %v2309, %v2310
    %v2312 = vsel %vm1415, %v2307, 0.0
    %v2313 = vadd.f32 %v2311, %v2312
    %v2314 = vsel %vm1415, %v2308, 0.0
    %v2315 = vadd.f32 %v2313, %v2314
    %2316 = vadd.xlane.f32.xlu0 %v2315
    %v2317 = vpop.xlane.xlu0 %2316
    %v2318 = vrot.slane %v2317, 4
    %v2319 = vadd.f32 %v2317, %v2318
    %v2320 = vrot.slane %v2319, 2
    %v2321 = vadd.f32 %v2319, %v2320
    %v2322 = vrot.slane %v2321, 1
    %v2323 = vadd.f32 %v2321, %v2322
    %s2324 = vtos %v2323
    %s2325 = smul.f32 %s2324, 0.001953125
    %s2326 = sld [smem:[#allocation10 + $0x7]]
    %s2327 = sadd.f32 %s2325, 1e-05
    %v2328 = vstv %s2327
    %v2329 = vrsqrt.pop %v2328
    %v2330 = vmul.f32 %v2329, %v2328
    %v2331 = vmul.f32 %v2330, %v2329
    %v2332 = vmul.f32 0.5, %v2331
    %v2333 = vsub.f32 1.5, %v2332
    %v2334 = vmul.f32 %v2329, %v2333
    %vm2335 = vweird.f32 %v2328
    %vm2336 = vweird.f32 %v2329
    %vm2337 = vmor %vm2335, %vm2336
    %v2338 = vsel %vm2337, %v2329, %v2334
    %s2339 = vtos %v2338
    %s2340 = smul.f32 %s2326, %s2339
    %v2341 = vstv %s2340
    %v2342 = vmul.f32 %v2301, %v2341
    %v2343 = vmul.f32 %v2302, %v2341
    %v2344 = vmul.f32 %v2303, %v2341
    %v2345 = vmul.f32 %v2304, %v2341
    %s2346 = sld [smem:[#allocation11 + $0x7]]
    %v2347 = vstv %s2346
    %v2348 = vadd.f32 %v2342, %v2347
    %v2349 = vadd.f32 %v2343, %v2347
    %v2350 = vadd.f32 %v2344, %v2347
    %v2351 = vadd.f32 %v2345, %v2347
    %vm2352 = vcmp.ge.f32.partialorder %v2348, 0.0
    %vm2353 = vcmp.ge.f32.partialorder %v2349, 0.0
    %vm2354 = vcmp.ge.f32.partialorder %v2350, 0.0
    %vm2355 = vcmp.ge.f32.partialorder %v2351, 0.0
    %s2356 = sld [smem:[#allocation13 + $0x7]]
    %v2357 = vstv %s2356
    %v2358 = vmul.f32 %v2348, %v2357
    %v2359 = vmul.f32 %v2349, %v2357
    %v2360 = vmul.f32 %v2350, %v2357
    %v2361 = vmul.f32 %v2351, %v2357
    %v2362 = vsel %vm2352, %v2348, %v2358
    %v2363 = vsel %vm2353, %v2349, %v2359
    %v2364 = vsel %vm2354, %v2350, %v2360
    %v2365 = vsel %vm2355, %v2351, %v2361
    %s2366 = scalar_lea.vmem [#allocation14], 112
    %2367 = vst.msk [vmem:[%s2366] sm:$0xff] %vm1415, %v2362
    %2368 = vst.msk [vmem:[%s2366 + $0x8] sm:$0xff] %vm1415, %v2363
    %2369 = vst.msk [vmem:[%s2366 + $0x80] sm:$0xff] %vm1415, %v2364
    %2370 = vst.msk [vmem:[%s2366 + $0x88] sm:$0xff] %vm1415, %v2365
    // Predicated region
    $region50: #{tpu_custom_call.1} parent=1 // pred_check
      _
    $region51: #{tpu_custom_call.1} parent=1 // pred_check_branch
      %2372 = sbr.rel (0) target = $region53
    $region52: #{tpu_custom_call.1} parent=1 // pred_region
      %2374 = vsyncadd [#allocation5], 0
      %s2375 = sshll.u32 [#allocation14], 4
      %s2376 = int_to_ptr.vmem [resolvable:$true] %s2375
      %s2377 = sshll.u32 %s6, 4
      %s2378 = int_to_ptr.hbm [resolvable:$true] %s2377
      %2383 = dma.vmem_to_hbm [thread:$0]  %s2376, 4096, %s2378, [#allocation5], 128, 128, 8
    $region53: #{tpu_custom_call.1} parent=1 // pred_fallthru
      _
    // Predicated region
    $region54: #{tpu_custom_call.1} parent=1 // pred_check
      _
    $region55: #{tpu_custom_call.1} parent=1 // pred_check_branch
      %2385 = sbr.rel (0) target = $region57
    $region56: #{tpu_custom_call.1} parent=1 // pred_region
      %2387 = dma.done [#allocation5], 4096
    $region57: #{tpu_custom_call.1} parent=1 // pred_fallthru
      _
    %2388 = vsyncpa [#allocation4], 1
    %2389 = vsyncpa [#allocation5], 1
    %2390 = vsyncpa [#allocation6], 1
    %2391 = vsyncpa [#allocation9], 1
    %2392 = vsyncpa [#allocation12], 1

</llo_original>
